<compile_context>
chip_gen: v5e
topology: v5e:2x2
jax: 0.10.0
libtpu: 0.0.40
codegen_flags: <defaults>
</compile_context>

<pallas_src>
import functools
import math

import jax
import jax.numpy as jnp
from jax import lax
from jax.experimental import pallas as pl
from jax.experimental.pallas import tpu as pltpu


def _round_up(x, m):
    return (x + m - 1) // m * m


def _pick_tile(d):
    # d is always a multiple of 128 here.
    for t in (512, 256, 128):
        if d % t == 0:
            return t
    return d


_INV_SQRT2 = 1.0 / math.sqrt(2.0)


def _gelu(y, approximate):
    if approximate:
        # tanh form: one EUP instruction, essentially free under the MXU.
        return jax.nn.gelu(y, approximate=True)
    # Exact erf form -> matches nn.GELU() default. Constant fused: 2 mul + 1 add.
    return y * (0.5 * lax.erf(y * jnp.float32(_INV_SQRT2)) + 0.5)


# ---------------------------------------------------------------------------
# Fused kernel: all layers back-to-back on the MXU, GELU between them.
# refs = (x_ref, w1, ..., wL, bias_all_ref, o_ref)
# ---------------------------------------------------------------------------
def _mlp_fused_kernel(*refs, n_layers, bias_slices, compute_dtype,
                      gelu_approximate):
    x_ref = refs[0]
    w_refs = refs[1:1 + n_layers]
    b_ref = refs[1 + n_layers]
    o_ref = refs[-1]

    y = x_ref[...].astype(jnp.float32)
    for i in range(n_layers):
        off, size = bias_slices[i]
        b = b_ref[:, off:off + size]                    # f32, lane-aligned static slice
        lhs = y.astype(compute_dtype)                   # no-op in f32 mode
        y = jnp.dot(lhs, w_refs[i][...],
                    preferred_element_type=jnp.float32) + b
        if i < n_layers - 1:
            y = _gelu(y, gelu_approximate)
    o_ref[...] = y.astype(o_ref.dtype)


# ---------------------------------------------------------------------------
# Fallback kernel: one Linear (+ optional GELU), tiled over (M, N, K) with an
# f32 accumulator scratch.  Used when resident weights do not fit VMEM.
# ---------------------------------------------------------------------------
def _linear_kernel(x_ref, w_ref, b_ref, o_ref, acc_ref, *,
                   apply_gelu, gelu_approximate, compute_dtype):
    k = pl.program_id(2)

    @pl.when(k == 0)
    def _():
        acc_ref[...] = jnp.zeros_like(acc_ref)

    acc_ref[...] += jnp.dot(x_ref[...].astype(compute_dtype), w_ref[...],
                            preferred_element_type=jnp.float32)

    @pl.when(k == pl.num_programs(2) - 1)
    def _():
        y = acc_ref[...] + b_ref[...].astype(jnp.float32)
        if apply_gelu:
            y = _gelu(y, gelu_approximate)
        o_ref[...] = y.astype(o_ref.dtype)


def _layerwise_forward(x, w_padded, b_padded, pdims, out_dim,
                       compute_dtype, gelu_approximate):
    m, k0 = x.shape
    n_layers = len(w_padded)
    m8 = _round_up(m, 8)
    tm = m8 if m8 <= 256 else 256
    m_pad = _round_up(m, tm)
    y = jnp.zeros((m_pad, pdims[0]), jnp.float32).at[:m, :k0].set(
        x.astype(jnp.float32))

    for i in range(n_layers):
        kin_p, kout_p = pdims[i], pdims[i + 1]
        tk, tn = _pick_tile(kin_p), _pick_tile(kout_p)
        grid = (m_pad // tm, kout_p // tn, kin_p // tk)
        kernel = functools.partial(
            _linear_kernel,
            apply_gelu=(i < n_layers - 1),
            gelu_approximate=gelu_approximate,
            compute_dtype=compute_dtype)
        y = pl.pallas_call(
            kernel,
            out_shape=jax.ShapeDtypeStruct((m_pad, kout_p), jnp.float32),
            grid=grid,
            in_specs=[pl.BlockSpec((tm, tk), lambda mi, ni, ki: (mi, ki)),
                      pl.BlockSpec((tk, tn), lambda mi, ni, ki: (ki, ni)),
                      pl.BlockSpec((1, tn), lambda mi, ni, ki: (0, ni))],
            out_specs=pl.BlockSpec((tm, tn), lambda mi, ni, ki: (mi, ni)),
            scratch_shapes=[pltpu.VMEM((tm, tn), jnp.float32)],
            compiler_params=pltpu.CompilerParams(
                dimension_semantics=("parallel", "parallel", "arbitrary")),
        )(y, w_padded[i], b_padded[i])

    return y[:m, :out_dim].astype(x.dtype)


# ---------------------------------------------------------------------------
# Wrapper: pad to TPU-friendly shapes, size tiles against the VMEM budget,
# build BlockSpecs, slice the result back.
# ---------------------------------------------------------------------------
def mlp_forward(x, params, *, use_bf16_mxu=False, gelu_approximate=False,
                force_layerwise=False):
    m, k0 = x.shape
    n_layers = len(params)
    out_dim = params[-1][0].shape[1]

    dims = [k0] + [w.shape[1] for (w, _) in params]
    pdims = [_round_up(d, 128) for d in dims]
    compute_dtype = jnp.bfloat16 if use_bf16_mxu else jnp.float32

    # Zero-pad parameters (exact: padded rows/cols contribute nothing, GELU(0)=0).
    w_padded, b_padded = [], []
    for i, (w, b) in enumerate(params):
        kin, kout = w.shape
        w_p = jnp.zeros((pdims[i], pdims[i + 1]), compute_dtype)
        w_p = w_p.at[:kin, :kout].set(w.astype(compute_dtype))
        b_p = jnp.zeros((1, pdims[i + 1]), jnp.float32).at[:, :kout].set(
            b.astype(jnp.float32))
        w_padded.append(w_p)
        b_padded.append(b_p)

    # --- VMEM budget / footprint model --------------------------------------
    try:
        physical_vmem = int(pltpu.get_tpu_info().vmem_capacity_bytes)
    except Exception:
        physical_vmem = 64 * 1024 * 1024   # conservative (v7x per-TC size)
    budget = int(physical_vmem * 0.85)

    wsize = jnp.dtype(compute_dtype).itemsize
    asize = jnp.dtype(x.dtype).itemsize
    weight_bytes = sum(pdims[i] * pdims[i + 1] for i in range(n_layers)) * wsize
    bias_bytes = sum(pdims[1:]) * 4
    # per-row bytes: double-buffered x / out tiles + live f32 intermediates
    # (input + output of the widest matmul, 2x slack for GELU / cast temporaries)
    per_row = (2 * pdims[0] * asize + 2 * pdims[-1] * asize
               + 2 * 4 * max(pdims[i] + pdims[i + 1] for i in range(n_layers)))
    slack = 2 << 20

    def fused_footprint(tm, weight_buffers):
        return weight_buffers * (weight_bytes + bias_bytes) + tm * per_row + slack

    fused_viable = fused_footprint(8, 1) <= budget
    if force_layerwise or not fused_viable:
        # Resident weights don't fit VMEM: tile each layer over (M, N, K).
        return _layerwise_forward(x, w_padded, b_padded, pdims, out_dim,
                                  compute_dtype, gelu_approximate)

    # --- batch tile selection -------------------------------------------------
    m8 = _round_up(m, 8)
    if m8 <= 512 and fused_footprint(m8, 1) <= budget:
        tm = m8
    else:
        tm = 8
        for cand in (1024, 512, 256, 128, 64, 32, 16, 8):
            if cand <= m8 and fused_footprint(cand, 1) <= budget:
                tm = cand
                break
    m_pad = _round_up(m, tm)

    x_p = jnp.zeros((m_pad, pdims[0]), x.dtype).at[:m, :k0].set(x)
    b_all = jnp.concatenate(b_padded, axis=1)        # one DMA for all biases
    bias_slices, off = [], 0
    for i in range(n_layers):
        bias_slices.append((off, pdims[i + 1]))
        off += pdims[i + 1]
    bias_slices = tuple(bias_slices)

    # Explicit scoped-VMEM limit (defaults are only 16/32 MiB); sized for the
    # worst case of double-buffered weights, capped below physical VMEM.
    vmem_limit = int(min(physical_vmem * 0.9,
                         max(fused_footprint(tm, 2) + (8 << 20), 32 << 20)))

    flops = sum(2 * m_pad * pdims[i] * pdims[i + 1] for i in range(n_layers))
    transcendentals = m_pad * sum(pdims[1:-1])
    bytes_accessed = (m_pad * pdims[0] * asize + weight_bytes + bias_bytes
                      + m_pad * pdims[-1] * asize)

    kernel = functools.partial(
        _mlp_fused_kernel,
        n_layers=n_layers,
        bias_slices=bias_slices,
        compute_dtype=compute_dtype,
        gelu_approximate=gelu_approximate)

    def run_fused(single_buffer_weights):
        wkw = ({"pipeline_mode": pl.Buffered(1)}
               if single_buffer_weights else {})
        in_specs = [pl.BlockSpec((tm, pdims[0]), lambda i: (i, 0))]
        for layer in range(n_layers):
            in_specs.append(
                pl.BlockSpec((pdims[layer], pdims[layer + 1]),
                             lambda i: (0, 0), **wkw))
        in_specs.append(
            pl.BlockSpec((1, b_all.shape[1]), lambda i: (0, 0), **wkw))
        out_spec = pl.BlockSpec((tm, pdims[-1]), lambda i: (i, 0))
        return pl.pallas_call(
            kernel,
            out_shape=jax.ShapeDtypeStruct((m_pad, pdims[-1]), x.dtype),
            grid=(m_pad // tm,),
            in_specs=in_specs,
            out_specs=out_spec,
            compiler_params=pltpu.CompilerParams(
                dimension_semantics=("parallel",),
                vmem_limit_bytes=vmem_limit),
            cost_estimate=pl.CostEstimate(
                flops=flops,
                transcendentals=transcendentals,
                bytes_accessed=bytes_accessed),
        )(x_p, *w_padded, b_all)

    out_padded = None
    for single_buffer_weights in (True, False):
        try:
            out_padded = run_fused(single_buffer_weights)
            break
        except Exception:
            out_padded = None
    if out_padded is None:
        # Last resort (unexpected VMEM pressure): per-layer tiled path.
        return _layerwise_forward(x, w_padded, b_padded, pdims, out_dim,
                                  compute_dtype, gelu_approximate)

    return out_padded[:m, :out_dim]


# ---------------------------------------------------------------------------
# Parameter init (nn.Linear default init range) and plain-JAX reference.
# ---------------------------------------------------------------------------
def init_mlp_params(key, input_dim, output_dim, hidden_layer):
    dims = [input_dim] + list(hidden_layer) + [output_dim]
    params = []
    for i in range(len(dims) - 1):
        fan_in, fan_out = dims[i], dims[i + 1]
        key, kw, kb = jax.random.split(key, 3)
        bound = 1.0 / math.sqrt(fan_in)
        w = jax.random.uniform(kw, (fan_in, fan_out), jnp.float32, -bound, bound)
        b = jax.random.uniform(kb, (1, fan_out), jnp.float32, -bound, bound)
        params.append((w, b))
    return params


def mlp_reference(x, params):
    n_layers = len(params)
    y = x
    for i, (w, b) in enumerate(params):
        y = y @ w + b
        if i < n_layers - 1:
            y = jax.nn.gelu(y, approximate=False)
    return y


if __name__ == "__main__":
    key = jax.random.PRNGKey(0)
    batch = 8
    input_dim = 32
    output_dim = 16
    hidden_layer = [128, 128, 128]  # small stand-in for default [512, 512, 512]

    kx, kp = jax.random.split(key)
    x = jax.random.normal(kx, (batch, input_dim), jnp.float32)
    params = init_mlp_params(kp, input_dim, output_dim, hidden_layer)
    ref = mlp_reference(x, params)

    # Main fused f32 path — bit-tight vs. the f32 reference.
    out = jax.block_until_ready(mlp_forward(x, params))
    assert out.shape == (batch, output_dim)
    assert jnp.allclose(out, ref, atol=1e-4, rtol=1e-4), "fused f32 mismatch"

    # Exercise the layer-tiled fallback path (used when weights exceed VMEM).
    out_lw = jax.block_until_ready(mlp_forward(x, params, force_layerwise=True))
    assert jnp.allclose(out_lw, ref, atol=1e-4, rtol=1e-4), "layerwise mismatch"

    # Exercise the bf16-MXU path (looser tolerance by construction).
    out_bf16 = jax.block_until_ready(mlp_forward(x, params, use_bf16_mxu=True))
    assert jnp.allclose(out_bf16, ref, atol=1e-1, rtol=1e-1), "bf16 mismatch"

    print("KERNEL_OK")
</pallas_src>

<mosaic_0001>
module attributes {stable_mosaic.version = 11 : i64} {
  func.func @_mlp_fused_kernel(%arg0: i32, %arg1: memref<8x128xf32, #tpu.memory_space<vmem>>, %arg2: memref<128x128xf32, #tpu.memory_space<vmem>>, %arg3: memref<128x128xf32, #tpu.memory_space<vmem>>, %arg4: memref<128x128xf32, #tpu.memory_space<vmem>>, %arg5: memref<128x128xf32, #tpu.memory_space<vmem>>, %arg6: memref<1x512xf32, #tpu.memory_space<vmem>>, %arg7: memref<8x128xf32, #tpu.memory_space<vmem>>) attributes {dimension_semantics = [#tpu.dimension_semantics<parallel>], iteration_bounds = array<i64: 1>, scalar_prefetch = 0 : i64, scratch_operands = 0 : i64, tpu.core_type = #tpu.core_type<tc>, window_params = [{transform_indices = @transform_0, window_bounds = array<i64: 8, 128>}, {pipeline_mode = #tpu.pipeline_mode<synchronous>, transform_indices = @transform_1, window_bounds = array<i64: 128, 128>}, {pipeline_mode = #tpu.pipeline_mode<synchronous>, transform_indices = @transform_2, window_bounds = array<i64: 128, 128>}, {pipeline_mode = #tpu.pipeline_mode<synchronous>, transform_indices = @transform_3, window_bounds = array<i64: 128, 128>}, {pipeline_mode = #tpu.pipeline_mode<synchronous>, transform_indices = @transform_4, window_bounds = array<i64: 128, 128>}, {pipeline_mode = #tpu.pipeline_mode<synchronous>, transform_indices = @transform_5, window_bounds = array<i64: 1, 512>}, {transform_indices = @transform_6, window_bounds = array<i64: 8, 128>}]} {
    %c0 = arith.constant 0 : index
    %c0_0 = arith.constant 0 : index
    %0 = vector.load %arg1[%c0, %c0_0] : memref<8x128xf32, #tpu.memory_space<vmem>>, vector<8x128xf32>
    %c0_1 = arith.constant 0 : index
    %c0_2 = arith.constant 0 : index
    %1 = vector.load %arg6[%c0_1, %c0_2] : memref<1x512xf32, #tpu.memory_space<vmem>>, vector<1x128xf32>
    %c0_3 = arith.constant 0 : index
    %c0_4 = arith.constant 0 : index
    %2 = vector.load %arg2[%c0_3, %c0_4] : memref<128x128xf32, #tpu.memory_space<vmem>>, vector<128x128xf32>
    %cst = arith.constant dense<0.000000e+00> : vector<8x128xf32>
    %3 = tpu.matmul %0, %2, %cst {dimension_numbers = #tpu.dot_dimension_numbers<[1], [0], [0], [1], [0, 0, 1, 1], [], []>} : vector<8x128xf32>, vector<128x128xf32>, vector<8x128xf32> -> vector<8x128xf32>
    %4 = vector.broadcast %1 : vector<1x128xf32> to vector<8x128xf32>
    %5 = arith.addf %3, %4 : vector<8x128xf32>
    %cst_5 = arith.constant 0.707106769 : f32
    %6 = vector.broadcast %cst_5 : f32 to vector<8x128xf32>
    %7 = arith.mulf %5, %6 : vector<8x128xf32>
    %8 = math.erf %7 : vector<8x128xf32>
    %cst_6 = arith.constant 5.000000e-01 : f32
    %9 = vector.broadcast %cst_6 : f32 to vector<8x128xf32>
    %10 = arith.mulf %9, %8 : vector<8x128xf32>
    %cst_7 = arith.constant 5.000000e-01 : f32
    %11 = vector.broadcast %cst_7 : f32 to vector<8x128xf32>
    %12 = arith.addf %10, %11 : vector<8x128xf32>
    %13 = arith.mulf %5, %12 : vector<8x128xf32>
    %c0_8 = arith.constant 0 : index
    %c128 = arith.constant 128 : index
    %14 = vector.load %arg6[%c0_8, %c128] : memref<1x512xf32, #tpu.memory_space<vmem>>, vector<1x128xf32>
    %c0_9 = arith.constant 0 : index
    %c0_10 = arith.constant 0 : index
    %15 = vector.load %arg3[%c0_9, %c0_10] : memref<128x128xf32, #tpu.memory_space<vmem>>, vector<128x128xf32>
    %cst_11 = arith.constant dense<0.000000e+00> : vector<8x128xf32>
    %16 = tpu.matmul %13, %15, %cst_11 {dimension_numbers = #tpu.dot_dimension_numbers<[1], [0], [0], [1], [0, 0, 1, 1], [], []>} : vector<8x128xf32>, vector<128x128xf32>, vector<8x128xf32> -> vector<8x128xf32>
    %17 = vector.broadcast %14 : vector<1x128xf32> to vector<8x128xf32>
    %18 = arith.addf %16, %17 : vector<8x128xf32>
    %cst_12 = arith.constant 0.707106769 : f32
    %19 = vector.broadcast %cst_12 : f32 to vector<8x128xf32>
    %20 = arith.mulf %18, %19 : vector<8x128xf32>
    %21 = math.erf %20 : vector<8x128xf32>
    %cst_13 = arith.constant 5.000000e-01 : f32
    %22 = vector.broadcast %cst_13 : f32 to vector<8x128xf32>
    %23 = arith.mulf %22, %21 : vector<8x128xf32>
    %cst_14 = arith.constant 5.000000e-01 : f32
    %24 = vector.broadcast %cst_14 : f32 to vector<8x128xf32>
    %25 = arith.addf %23, %24 : vector<8x128xf32>
    %26 = arith.mulf %18, %25 : vector<8x128xf32>
    %c0_15 = arith.constant 0 : index
    %c256 = arith.constant 256 : index
    %27 = vector.load %arg6[%c0_15, %c256] : memref<1x512xf32, #tpu.memory_space<vmem>>, vector<1x128xf32>
    %c0_16 = arith.constant 0 : index
    %c0_17 = arith.constant 0 : index
    %28 = vector.load %arg4[%c0_16, %c0_17] : memref<128x128xf32, #tpu.memory_space<vmem>>, vector<128x128xf32>
    %cst_18 = arith.constant dense<0.000000e+00> : vector<8x128xf32>
    %29 = tpu.matmul %26, %28, %cst_18 {dimension_numbers = #tpu.dot_dimension_numbers<[1], [0], [0], [1], [0, 0, 1, 1], [], []>} : vector<8x128xf32>, vector<128x128xf32>, vector<8x128xf32> -> vector<8x128xf32>
    %30 = vector.broadcast %27 : vector<1x128xf32> to vector<8x128xf32>
    %31 = arith.addf %29, %30 : vector<8x128xf32>
    %cst_19 = arith.constant 0.707106769 : f32
    %32 = vector.broadcast %cst_19 : f32 to vector<8x128xf32>
    %33 = arith.mulf %31, %32 : vector<8x128xf32>
    %34 = math.erf %33 : vector<8x128xf32>
    %cst_20 = arith.constant 5.000000e-01 : f32
    %35 = vector.broadcast %cst_20 : f32 to vector<8x128xf32>
    %36 = arith.mulf %35, %34 : vector<8x128xf32>
    %cst_21 = arith.constant 5.000000e-01 : f32
    %37 = vector.broadcast %cst_21 : f32 to vector<8x128xf32>
    %38 = arith.addf %36, %37 : vector<8x128xf32>
    %39 = arith.mulf %31, %38 : vector<8x128xf32>
    %c0_22 = arith.constant 0 : index
    %c384 = arith.constant 384 : index
    %40 = vector.load %arg6[%c0_22, %c384] : memref<1x512xf32, #tpu.memory_space<vmem>>, vector<1x128xf32>
    %c0_23 = arith.constant 0 : index
    %c0_24 = arith.constant 0 : index
    %41 = vector.load %arg5[%c0_23, %c0_24] : memref<128x128xf32, #tpu.memory_space<vmem>>, vector<128x128xf32>
    %cst_25 = arith.constant dense<0.000000e+00> : vector<8x128xf32>
    %42 = tpu.matmul %39, %41, %cst_25 {dimension_numbers = #tpu.dot_dimension_numbers<[1], [0], [0], [1], [0, 0, 1, 1], [], []>} : vector<8x128xf32>, vector<128x128xf32>, vector<8x128xf32> -> vector<8x128xf32>
    %43 = vector.broadcast %40 : vector<1x128xf32> to vector<8x128xf32>
    %44 = arith.addf %42, %43 : vector<8x128xf32>
    %c0_26 = arith.constant 0 : index
    %c0_27 = arith.constant 0 : index
    %45 = vector.load %arg7[%c0_26, %c0_27] : memref<8x128xf32, #tpu.memory_space<vmem>>, vector<8x128xf32>
    tpu.vector_store %arg7[%c0_26, %c0_27], %44 {strides = array<i32>} : memref<8x128xf32, #tpu.memory_space<vmem>>, vector<8x128xf32>,
    return
  }
  func.func @transform_0(%arg0: i32) -> (i32, i32) {
    %c0_i32 = arith.constant 0 : i32
    %c0_i32_0 = arith.constant 0 : i32
    return %arg0, %c0_i32 : i32, i32
  }
  func.func @transform_1(%arg0: i32) -> (i32, i32) {
    %c0_i32 = arith.constant 0 : i32
    %c0_i32_0 = arith.constant 0 : i32
    %c0_i32_1 = arith.constant 0 : i32
    return %c0_i32, %c0_i32_0 : i32, i32
  }
  func.func @transform_2(%arg0: i32) -> (i32, i32) {
    %c0_i32 = arith.constant 0 : i32
    %c0_i32_0 = arith.constant 0 : i32
    %c0_i32_1 = arith.constant 0 : i32
    return %c0_i32, %c0_i32_0 : i32, i32
  }
  func.func @transform_3(%arg0: i32) -> (i32, i32) {
    %c0_i32 = arith.constant 0 : i32
    %c0_i32_0 = arith.constant 0 : i32
    %c0_i32_1 = arith.constant 0 : i32
    return %c0_i32, %c0_i32_0 : i32, i32
  }
  func.func @transform_4(%arg0: i32) -> (i32, i32) {
    %c0_i32 = arith.constant 0 : i32
    %c0_i32_0 = arith.constant 0 : i32
    %c0_i32_1 = arith.constant 0 : i32
    return %c0_i32, %c0_i32_0 : i32, i32
  }
  func.func @transform_5(%arg0: i32) -> (i32, i32) {
    %c0_i32 = arith.constant 0 : i32
    %c0_i32_0 = arith.constant 0 : i32
    %c0_i32_1 = arith.constant 0 : i32
    return %c0_i32, %c0_i32_0 : i32, i32
  }
  func.func @transform_6(%arg0: i32) -> (i32, i32) {
    %c0_i32 = arith.constant 0 : i32
    %c0_i32_0 = arith.constant 0 : i32
    return %arg0, %c0_i32 : i32, i32
  }
}

module attributes {stable_mosaic.version = 11 : i64} {
  func.func @_mlp_fused_kernel(%arg0: i32, %arg1: memref<8x128xf32, #tpu.memory_space<vmem>>, %arg2: memref<128x128xf32, #tpu.memory_space<vmem>>, %arg3: memref<128x128xf32, #tpu.memory_space<vmem>>, %arg4: memref<128x128xf32, #tpu.memory_space<vmem>>, %arg5: memref<128x128xf32, #tpu.memory_space<vmem>>, %arg6: memref<1x512xf32, #tpu.memory_space<vmem>>, %arg7: memref<8x128xf32, #tpu.memory_space<vmem>>) attributes {dimension_semantics = [#tpu.dimension_semantics<parallel>], iteration_bounds = array<i64: 1>, scalar_prefetch = 0 : i64, scratch_operands = 0 : i64, tpu.core_type = #tpu.core_type<tc>, window_params = [{transform_indices = @transform_0, window_bounds = array<i64: 8, 128>}, {pipeline_mode = #tpu.pipeline_mode<synchronous>, transform_indices = @transform_1, window_bounds = array<i64: 128, 128>}, {pipeline_mode = #tpu.pipeline_mode<synchronous>, transform_indices = @transform_2, window_bounds = array<i64: 128, 128>}, {pipeline_mode = #tpu.pipeline_mode<synchronous>, transform_indices = @transform_3, window_bounds = array<i64: 128, 128>}, {pipeline_mode = #tpu.pipeline_mode<synchronous>, transform_indices = @transform_4, window_bounds = array<i64: 128, 128>}, {pipeline_mode = #tpu.pipeline_mode<synchronous>, transform_indices = @transform_5, window_bounds = array<i64: 1, 512>}, {transform_indices = @transform_6, window_bounds = array<i64: 8, 128>}]} {
    %c0 = arith.constant 0 : index
    %c0_0 = arith.constant 0 : index
    %0 = vector.load %arg1[%c0, %c0_0] : memref<8x128xf32, #tpu.memory_space<vmem>>, vector<8x128xf32>
    %c0_1 = arith.constant 0 : index
    %c0_2 = arith.constant 0 : index
    %1 = vector.load %arg6[%c0_1, %c0_2] : memref<1x512xf32, #tpu.memory_space<vmem>>, vector<1x128xf32>
    %c0_3 = arith.constant 0 : index
    %c0_4 = arith.constant 0 : index
    %2 = vector.load %arg2[%c0_3, %c0_4] : memref<128x128xf32, #tpu.memory_space<vmem>>, vector<128x128xf32>
    %cst = arith.constant dense<0.000000e+00> : vector<8x128xf32>
    %3 = tpu.matmul %0, %2, %cst {dimension_numbers = #tpu.dot_dimension_numbers<[1], [0], [0], [1], [0, 0, 1, 1], [], []>} : vector<8x128xf32>, vector<128x128xf32>, vector<8x128xf32> -> vector<8x128xf32>
    %4 = vector.broadcast %1 : vector<1x128xf32> to vector<8x128xf32>
    %5 = arith.addf %3, %4 : vector<8x128xf32>
    %cst_5 = arith.constant 0.707106769 : f32
    %6 = vector.broadcast %cst_5 : f32 to vector<8x128xf32>
    %7 = arith.mulf %5, %6 : vector<8x128xf32>
    %8 = math.erf %7 : vector<8x128xf32>
    %cst_6 = arith.constant 5.000000e-01 : f32
    %9 = vector.broadcast %cst_6 : f32 to vector<8x128xf32>
    %10 = arith.mulf %9, %8 : vector<8x128xf32>
    %cst_7 = arith.constant 5.000000e-01 : f32
    %11 = vector.broadcast %cst_7 : f32 to vector<8x128xf32>
    %12 = arith.addf %10, %11 : vector<8x128xf32>
    %13 = arith.mulf %5, %12 : vector<8x128xf32>
    %c0_8 = arith.constant 0 : index
    %c128 = arith.constant 128 : index
    %14 = vector.load %arg6[%c0_8, %c128] : memref<1x512xf32, #tpu.memory_space<vmem>>, vector<1x128xf32>
    %c0_9 = arith.constant 0 : index
    %c0_10 = arith.constant 0 : index
    %15 = vector.load %arg3[%c0_9, %c0_10] : memref<128x128xf32, #tpu.memory_space<vmem>>, vector<128x128xf32>
    %cst_11 = arith.constant dense<0.000000e+00> : vector<8x128xf32>
    %16 = tpu.matmul %13, %15, %cst_11 {dimension_numbers = #tpu.dot_dimension_numbers<[1], [0], [0], [1], [0, 0, 1, 1], [], []>} : vector<8x128xf32>, vector<128x128xf32>, vector<8x128xf32> -> vector<8x128xf32>
    %17 = vector.broadcast %14 : vector<1x128xf32> to vector<8x128xf32>
    %18 = arith.addf %16, %17 : vector<8x128xf32>
    %cst_12 = arith.constant 0.707106769 : f32
    %19 = vector.broadcast %cst_12 : f32 to vector<8x128xf32>
    %20 = arith.mulf %18, %19 : vector<8x128xf32>
    %21 = math.erf %20 : vector<8x128xf32>
    %cst_13 = arith.constant 5.000000e-01 : f32
    %22 = vector.broadcast %cst_13 : f32 to vector<8x128xf32>
    %23 = arith.mulf %22, %21 : vector<8x128xf32>
    %cst_14 = arith.constant 5.000000e-01 : f32
    %24 = vector.broadcast %cst_14 : f32 to vector<8x128xf32>
    %25 = arith.addf %23, %24 : vector<8x128xf32>
    %26 = arith.mulf %18, %25 : vector<8x128xf32>
    %c0_15 = arith.constant 0 : index
    %c256 = arith.constant 256 : index
    %27 = vector.load %arg6[%c0_15, %c256] : memref<1x512xf32, #tpu.memory_space<vmem>>, vector<1x128xf32>
    %c0_16 = arith.constant 0 : index
    %c0_17 = arith.constant 0 : index
    %28 = vector.load %arg4[%c0_16, %c0_17] : memref<128x128xf32, #tpu.memory_space<vmem>>, vector<128x128xf32>
    %cst_18 = arith.constant dense<0.000000e+00> : vector<8x128xf32>
    %29 = tpu.matmul %26, %28, %cst_18 {dimension_numbers = #tpu.dot_dimension_numbers<[1], [0], [0], [1], [0, 0, 1, 1], [], []>} : vector<8x128xf32>, vector<128x128xf32>, vector<8x128xf32> -> vector<8x128xf32>
    %30 = vector.broadcast %27 : vector<1x128xf32> to vector<8x128xf32>
    %31 = arith.addf %29, %30 : vector<8x128xf32>
    %cst_19 = arith.constant 0.707106769 : f32
    %32 = vector.broadcast %cst_19 : f32 to vector<8x128xf32>
    %33 = arith.mulf %31, %32 : vector<8x128xf32>
    %34 = math.erf %33 : vector<8x128xf32>
    %cst_20 = arith.constant 5.000000e-01 : f32
    %35 = vector.broadcast %cst_20 : f32 to vector<8x128xf32>
    %36 = arith.mulf %35, %34 : vector<8x128xf32>
    %cst_21 = arith.constant 5.000000e-01 : f32
    %37 = vector.broadcast %cst_21 : f32 to vector<8x128xf32>
    %38 = arith.addf %36, %37 : vector<8x128xf32>
    %39 = arith.mulf %31, %38 : vector<8x128xf32>
    %c0_22 = arith.constant 0 : index
    %c384 = arith.constant 384 : index
    %40 = vector.load %arg6[%c0_22, %c384] : memref<1x512xf32, #tpu.memory_space<vmem>>, vector<1x128xf32>
    %c0_23 = arith.constant 0 : index
    %c0_24 = arith.constant 0 : index
    %41 = vector.load %arg5[%c0_23, %c0_24] : memref<128x128xf32, #tpu.memory_space<vmem>>, vector<128x128xf32>
    %cst_25 = arith.constant dense<0.000000e+00> : vector<8x128xf32>
    %42 = tpu.matmul %39, %41, %cst_25 {dimension_numbers = #tpu.dot_dimension_numbers<[1], [0], [0], [1], [0, 0, 1, 1], [], []>} : vector<8x128xf32>, vector<128x128xf32>, vector<8x128xf32> -> vector<8x128xf32>
    %43 = vector.broadcast %40 : vector<1x128xf32> to vector<8x128xf32>
    %44 = arith.addf %42, %43 : vector<8x128xf32>
    %c0_26 = arith.constant 0 : index
    %c0_27 = arith.constant 0 : index
    %45 = vector.load %arg7[%c0_26, %c0_27] : memref<8x128xf32, #tpu.memory_space<vmem>>, vector<8x128xf32>
    tpu.vector_store %arg7[%c0_26, %c0_27], %44 {strides = array<i32>} : memref<8x128xf32, #tpu.memory_space<vmem>>, vector<8x128xf32>,
    return
  }
  func.func @transform_0(%arg0: i32) -> (i32, i32) {
    %c0_i32 = arith.constant 0 : i32
    %c0_i32_0 = arith.constant 0 : i32
    return %arg0, %c0_i32 : i32, i32
  }
  func.func @transform_1(%arg0: i32) -> (i32, i32) {
    %c0_i32 = arith.constant 0 : i32
    %c0_i32_0 = arith.constant 0 : i32
    %c0_i32_1 = arith.constant 0 : i32
    return %c0_i32, %c0_i32_0 : i32, i32
  }
  func.func @transform_2(%arg0: i32) -> (i32, i32) {
    %c0_i32 = arith.constant 0 : i32
    %c0_i32_0 = arith.constant 0 : i32
    %c0_i32_1 = arith.constant 0 : i32
    return %c0_i32, %c0_i32_0 : i32, i32
  }
  func.func @transform_3(%arg0: i32) -> (i32, i32) {
    %c0_i32 = arith.constant 0 : i32
    %c0_i32_0 = arith.constant 0 : i32
    %c0_i32_1 = arith.constant 0 : i32
    return %c0_i32, %c0_i32_0 : i32, i32
  }
  func.func @transform_4(%arg0: i32) -> (i32, i32) {
    %c0_i32 = arith.constant 0 : i32
    %c0_i32_0 = arith.constant 0 : i32
    %c0_i32_1 = arith.constant 0 : i32
    return %c0_i32, %c0_i32_0 : i32, i32
  }
  func.func @transform_5(%arg0: i32) -> (i32, i32) {
    %c0_i32 = arith.constant 0 : i32
    %c0_i32_0 = arith.constant 0 : i32
    %c0_i32_1 = arith.constant 0 : i32
    return %c0_i32, %c0_i32_0 : i32, i32
  }
  func.func @transform_6(%arg0: i32) -> (i32, i32) {
    %c0_i32 = arith.constant 0 : i32
    %c0_i32_0 = arith.constant 0 : i32
    return %arg0, %c0_i32 : i32, i32
  }
}

module attributes {stable_mosaic.version = 11 : i64} {
  func.func @_linear_kernel(%arg0: i32, %arg1: i32, %arg2: i32, %arg3: memref<8x128xf32, #tpu.memory_space<vmem>>, %arg4: memref<128x128xf32, #tpu.memory_space<vmem>>, %arg5: memref<1x128xf32, #tpu.memory_space<vmem>>, %arg6: memref<8x128xf32, #tpu.memory_space<vmem>>, %arg7: memref<8x128xf32, #tpu.memory_space<vmem>>) attributes {dimension_semantics = [#tpu.dimension_semantics<parallel>, #tpu.dimension_semantics<parallel>, #tpu.dimension_semantics<arbitrary>], iteration_bounds = array<i64: 1, 1, 1>, scalar_prefetch = 0 : i64, scratch_operands = 1 : i64, tpu.core_type = #tpu.core_type<tc>, window_params = [{transform_indices = @transform_0, window_bounds = array<i64: 8, 128>}, {transform_indices = @transform_1, window_bounds = array<i64: 128, 128>}, {transform_indices = @transform_2, window_bounds = array<i64: 1, 128>}, {transform_indices = @transform_3, window_bounds = array<i64: 8, 128>}]} {
    %c0_i32 = arith.constant 0 : i32
    %0 = arith.cmpi eq, %arg2, %c0_i32 : i32
    %1 = arith.extui %0 : i1 to i32
    %c0_i32_0 = arith.constant 0 : i32
    %2 = arith.cmpi ne, %1, %c0_i32_0 : i32
    scf.if %2 {
      %cst_10 = arith.constant 0.000000e+00 : f32
      %12 = vector.broadcast %cst_10 : f32 to vector<8x128xf32>
      %c0_11 = arith.constant 0 : index
      %c0_12 = arith.constant 0 : index
      %13 = vector.load %arg7[%c0_11, %c0_12] : memref<8x128xf32, #tpu.memory_space<vmem>>, vector<8x128xf32>
      tpu.vector_store %arg7[%c0_11, %c0_12], %12 {strides = array<i32>} : memref<8x128xf32, #tpu.memory_space<vmem>>, vector<8x128xf32>,
    } else {
    }
    %c0 = arith.constant 0 : index
    %c0_1 = arith.constant 0 : index
    %3 = vector.load %arg7[%c0, %c0_1] : memref<8x128xf32, #tpu.memory_space<vmem>>, vector<8x128xf32>
    %c0_2 = arith.constant 0 : index
    %c0_3 = arith.constant 0 : index
    %4 = vector.load %arg3[%c0_2, %c0_3] : memref<8x128xf32, #tpu.memory_space<vmem>>, vector<8x128xf32>
    %c0_4 = arith.constant 0 : index
    %c0_5 = arith.constant 0 : index
    %5 = vector.load %arg4[%c0_4, %c0_5] : memref<128x128xf32, #tpu.memory_space<vmem>>, vector<128x128xf32>
    %cst = arith.constant dense<0.000000e+00> : vector<8x128xf32>
    %6 = tpu.matmul %4, %5, %cst {dimension_numbers = #tpu.dot_dimension_numbers<[1], [0], [0], [1], [0, 0, 1, 1], [], []>} : vector<8x128xf32>, vector<128x128xf32>, vector<8x128xf32> -> vector<8x128xf32>
    %7 = arith.addf %3, %6 : vector<8x128xf32>
    %c0_6 = arith.constant 0 : index
    %c0_7 = arith.constant 0 : index
    %8 = vector.load %arg7[%c0_6, %c0_7] : memref<8x128xf32, #tpu.memory_space<vmem>>, vector<8x128xf32>
    tpu.vector_store %arg7[%c0_6, %c0_7], %7 {strides = array<i32>} : memref<8x128xf32, #tpu.memory_space<vmem>>, vector<8x128xf32>,
    %c0_i32_8 = arith.constant 0 : i32
    %9 = arith.cmpi eq, %arg2, %c0_i32_8 : i32
    %10 = arith.extui %9 : i1 to i32
    %c0_i32_9 = arith.constant 0 : i32
    %11 = arith.cmpi ne, %10, %c0_i32_9 : i32
    scf.if %11 {
      %c0_10 = arith.constant 0 : index
      %c0_11 = arith.constant 0 : index
      %12 = vector.load %arg7[%c0_10, %c0_11] : memref<8x128xf32, #tpu.memory_space<vmem>>, vector<8x128xf32>
      %c0_12 = arith.constant 0 : index
      %c0_13 = arith.constant 0 : index
      %13 = vector.load %arg5[%c0_12, %c0_13] : memref<1x128xf32, #tpu.memory_space<vmem>>, vector<1x128xf32>
      %14 = vector.broadcast %13 : vector<1x128xf32> to vector<8x128xf32>
      %15 = arith.addf %12, %14 : vector<8x128xf32>
      %cst_14 = arith.constant 0.707106769 : f32
      %16 = vector.broadcast %cst_14 : f32 to vector<8x128xf32>
      %17 = arith.mulf %15, %16 : vector<8x128xf32>
      %18 = math.erf %17 : vector<8x128xf32>
      %cst_15 = arith.constant 5.000000e-01 : f32
      %19 = vector.broadcast %cst_15 : f32 to vector<8x128xf32>
      %20 = arith.mulf %19, %18 : vector<8x128xf32>
      %cst_16 = arith.constant 5.000000e-01 : f32
      %21 = vector.broadcast %cst_16 : f32 to vector<8x128xf32>
      %22 = arith.addf %20, %21 : vector<8x128xf32>
      %23 = arith.mulf %15, %22 : vector<8x128xf32>
      %c0_17 = arith.constant 0 : index
      %c0_18 = arith.constant 0 : index
      %24 = vector.load %arg6[%c0_17, %c0_18] : memref<8x128xf32, #tpu.memory_space<vmem>>, vector<8x128xf32>
      tpu.vector_store %arg6[%c0_17, %c0_18], %23 {strides = array<i32>} : memref<8x128xf32, #tpu.memory_space<vmem>>, vector<8x128xf32>,
    } else {
    }
    return
  }
  func.func @transform_0(%arg0: i32, %arg1: i32, %arg2: i32) -> (i32, i32) {
    %c0_i32 = arith.constant 0 : i32
    return %arg0, %arg2 : i32, i32
  }
  func.func @transform_1(%arg0: i32, %arg1: i32, %arg2: i32) -> (i32, i32) {
    %c0_i32 = arith.constant 0 : i32
    return %arg2, %arg1 : i32, i32
  }
  func.func @transform_2(%arg0: i32, %arg1: i32, %arg2: i32) -> (i32, i32) {
    %c0_i32 = arith.constant 0 : i32
    %c0_i32_0 = arith.constant 0 : i32
    return %c0_i32, %arg1 : i32, i32
  }
  func.func @transform_3(%arg0: i32, %arg1: i32, %arg2: i32) -> (i32, i32) {
    %c0_i32 = arith.constant 0 : i32
    return %arg0, %arg1 : i32, i32
  }
}

</mosaic_0001>

<llo_original>
// kernel: tpu_custom_call.1
$region0: #{tpu_custom_call.1}
  #allocation0 [shape = 'u32[]', space=smem, size = 0x4, offset = 0x4, fixed_abs, tag = 'smem constant byte address 0x4 - core index']
  #allocation1 [shape = 'u32[72,128]{1,0:T(1,128)}', space=vmem, size = 0x9000, scoped, tag = 'internal scratch']
  %s0 = inlined_call_operand.hbm [shape: f32[8,128], index: 0, kind: input, shape index: {}]
  %s1 = inlined_call_operand.hbm [shape: f32[128,128], index: 1, kind: input, shape index: {}]
  %s2 = inlined_call_operand.hbm [shape: f32[128,128], index: 2, kind: input, shape index: {}]
  %s3 = inlined_call_operand.hbm [shape: f32[128,128], index: 3, kind: input, shape index: {}]
  %s4 = inlined_call_operand.hbm [shape: f32[128,128], index: 4, kind: input, shape index: {}]
  %s5 = inlined_call_operand.vmem [shape: f32[1,512], index: 5, kind: input, shape index: {}]
  %s6 = inlined_call_operand.hbm [shape: f32[8,128], index: 6, kind: output, shape index: {}]
  %s7 = sld [smem:[#allocation0]]
  $region54: #{tpu_custom_call.1} parent=0
    _
  %s9 = ssub.s32 1, %s7
  %s10 = scalar_select 0, %s9, %s7
  $region1: #{tpu_custom_call.1} parent=0
    #allocation2 [shape = 'u8[4096]{0}', space=vmem, size = 0x1000, scoped, tag = 'input window, operand 0, single buffered']
    #allocation3 [shape = 's32[1]{0}', space=sflag, size = 0x4, scoped, tag = 'scoped memory for tpu_custom_call.1']
    #allocation4 [shape = 's32[1]{0}', space=sflag, size = 0x4, scoped, tag = 'scoped memory for tpu_custom_call.1']
    #allocation5 [shape = 'u8[65536]{0}', space=vmem, size = 0x10000, scoped, tag = 'input window, operand 1, single buffered']
    #allocation6 [shape = 's32[1]{0}', space=sflag, size = 0x4, scoped, tag = 'scoped memory for tpu_custom_call.1']
    #allocation7 [shape = 'u8[65536]{0}', space=vmem, size = 0x10000, scoped, tag = 'input window, operand 2, single buffered']
    #allocation8 [shape = 'u8[65536]{0}', space=vmem, size = 0x10000, scoped, tag = 'input window, operand 3, single buffered']
    #allocation9 [shape = 's32[1]{0}', space=sflag, size = 0x4, scoped, tag = 'scoped memory for tpu_custom_call.1']
    #allocation10 [shape = 'u8[65536]{0}', space=vmem, size = 0x10000, scoped, tag = 'input window, operand 4, single buffered']
    #allocation11 [shape = 'u8[4096]{0}', space=vmem, size = 0x1000, scoped, tag = 'output window, operand 0, single buffered']
    %11 = vsyncpa [#allocation3], 0
    %12 = vsyncpa [#allocation6], 0
    %13 = vsyncpa [#allocation9], 0
    %14 = vsyncpa [#allocation4], 0
    // Predicated region
    $region2: #{tpu_custom_call.1} parent=1 // pred_check
      _
    $region3: #{tpu_custom_call.1} parent=1 // pred_check_branch
      %16 = sbr.rel (0) target = $region5
    $region4: #{tpu_custom_call.1} parent=1 // pred_region
      %18 = vsyncadd [#allocation3], 0
      %s20 = sshll.u32 %s0, 4
      %s21 = int_to_ptr.hbm [resolvable:$true] %s20
      %s22 = sshll.u32 [#allocation2], 4
      %s23 = int_to_ptr.vmem [resolvable:$true] %s22
      %25 = dma.hbm_to_vmem [thread:$0]  %s21, 128, %s23, [#allocation3]
    $region5: #{tpu_custom_call.1} parent=1 // pred_fallthru
      _
    // Predicated region
    $region6: #{tpu_custom_call.1} parent=1 // pred_check
      _
    $region7: #{tpu_custom_call.1} parent=1 // pred_check_branch
      %27 = sbr.rel (0) target = $region9
    $region8: #{tpu_custom_call.1} parent=1 // pred_region
      %29 = vsyncadd [#allocation6], 0
      %s30 = sshll.u32 %s1, 4
      %s31 = int_to_ptr.hbm [resolvable:$true] %s30
      %s32 = sshll.u32 [#allocation5], 4
      %s33 = int_to_ptr.vmem [resolvable:$true] %s32
      %38 = dma.hbm_to_vmem [thread:$0]  %s31, 2048, %s33, [#allocation6], 128, 128, 8
    $region9: #{tpu_custom_call.1} parent=1 // pred_fallthru
      _
    // Predicated region
    $region10: #{tpu_custom_call.1} parent=1 // pred_check
      _
    $region11: #{tpu_custom_call.1} parent=1 // pred_check_branch
      %40 = sbr.rel (0) target = $region13
    $region12: #{tpu_custom_call.1} parent=1 // pred_region
      %42 = vsyncadd [#allocation6], 0
      %s43 = sshll.u32 %s2, 4
      %s44 = int_to_ptr.hbm [resolvable:$true] %s43
      %s45 = sshll.u32 [#allocation7], 4
      %s46 = int_to_ptr.vmem [resolvable:$true] %s45
      %51 = dma.hbm_to_vmem [thread:$0]  %s44, 2048, %s46, [#allocation6], 128, 128, 8
    $region13: #{tpu_custom_call.1} parent=1 // pred_fallthru
      _
    // Predicated region
    $region14: #{tpu_custom_call.1} parent=1 // pred_check
      _
    $region15: #{tpu_custom_call.1} parent=1 // pred_check_branch
      %53 = sbr.rel (0) target = $region17
    $region16: #{tpu_custom_call.1} parent=1 // pred_region
      %55 = vsyncadd [#allocation9], 0
      %s56 = sshll.u32 %s3, 4
      %s57 = int_to_ptr.hbm [resolvable:$true] %s56
      %s58 = sshll.u32 [#allocation8], 4
      %s59 = int_to_ptr.vmem [resolvable:$true] %s58
      %64 = dma.hbm_to_vmem [thread:$0]  %s57, 2048, %s59, [#allocation9], 128, 128, 8
    $region17: #{tpu_custom_call.1} parent=1 // pred_fallthru
      _
    // Predicated region
    $region18: #{tpu_custom_call.1} parent=1 // pred_check
      _
    $region19: #{tpu_custom_call.1} parent=1 // pred_check_branch
      %66 = sbr.rel (0) target = $region21
    $region20: #{tpu_custom_call.1} parent=1 // pred_region
      %68 = vsyncadd [#allocation9], 0
      %s69 = sshll.u32 %s4, 4
      %s70 = int_to_ptr.hbm [resolvable:$true] %s69
      %s71 = sshll.u32 [#allocation10], 4
      %s72 = int_to_ptr.vmem [resolvable:$true] %s71
      %77 = dma.hbm_to_vmem [thread:$0]  %s70, 2048, %s72, [#allocation9], 128, 128, 8
    $region21: #{tpu_custom_call.1} parent=1 // pred_fallthru
      _
    // Predicated region
    $region22: #{tpu_custom_call.1} parent=1 // pred_check
      _
    $region23: #{tpu_custom_call.1} parent=1 // pred_check_branch
      %79 = sbr.rel (0) target = $region25
    $region24: #{tpu_custom_call.1} parent=1 // pred_region
      _
    $region25: #{tpu_custom_call.1} parent=1 // pred_fallthru
      _
    // Predicated region
    $region26: #{tpu_custom_call.1} parent=1 // pred_check
      _
    $region27: #{tpu_custom_call.1} parent=1 // pred_check_branch
      %81 = sbr.rel (0) target = $region29
    $region28: #{tpu_custom_call.1} parent=1 // pred_region
      %83 = dma.done [#allocation3], 128
    $region29: #{tpu_custom_call.1} parent=1 // pred_fallthru
      _
    // Predicated region
    $region30: #{tpu_custom_call.1} parent=1 // pred_check
      _
    $region31: #{tpu_custom_call.1} parent=1 // pred_check_branch
      %85 = sbr.rel (0) target = $region33
    $region32: #{tpu_custom_call.1} parent=1 // pred_region
      %87 = dma.done [#allocation6], 2048
    $region33: #{tpu_custom_call.1} parent=1 // pred_fallthru
      _
    // Predicated region
    $region34: #{tpu_custom_call.1} parent=1 // pred_check
      _
    $region35: #{tpu_custom_call.1} parent=1 // pred_check_branch
      %89 = sbr.rel (0) target = $region37
    $region36: #{tpu_custom_call.1} parent=1 // pred_region
      %91 = dma.done [#allocation6], 2048
    $region37: #{tpu_custom_call.1} parent=1 // pred_fallthru
      _
    // Predicated region
    $region38: #{tpu_custom_call.1} parent=1 // pred_check
      _
    $region39: #{tpu_custom_call.1} parent=1 // pred_check_branch
      %93 = sbr.rel (0) target = $region41
    $region40: #{tpu_custom_call.1} parent=1 // pred_region
      %95 = dma.done [#allocation9], 2048
    $region41: #{tpu_custom_call.1} parent=1 // pred_fallthru
      _
    // Predicated region
    $region42: #{tpu_custom_call.1} parent=1 // pred_check
      _
    $region43: #{tpu_custom_call.1} parent=1 // pred_check_branch
      %97 = sbr.rel (0) target = $region45
    $region44: #{tpu_custom_call.1} parent=1 // pred_region
      %99 = dma.done [#allocation9], 2048
    $region45: #{tpu_custom_call.1} parent=1 // pred_fallthru
      _
    %v100 = vld [vmem:[#allocation2] sm:$0xff]
    %v101 = vld [vmem:[%s5] sm:$0x1]
    %v102 = vld [vmem:[#allocation5] sm:$0xff]
    %v103 = vld [vmem:[#allocation5 + $0x8] sm:$0xff]
    %v104 = vld [vmem:[#allocation5 + $0x10] sm:$0xff]
    %v105 = vld [vmem:[#allocation5 + $0x18] sm:$0xff]
    %v106 = vld [vmem:[#allocation5 + $0x20] sm:$0xff]
    %v107 = vld [vmem:[#allocation5 + $0x28] sm:$0xff]
    %v108 = vld [vmem:[#allocation5 + $0x30] sm:$0xff]
    %v109 = vld [vmem:[#allocation5 + $0x38] sm:$0xff]
    %v110 = vld [vmem:[#allocation5 + $0x40] sm:$0xff]
    %v111 = vld [vmem:[#allocation5 + $0x48] sm:$0xff]
    %v112 = vld [vmem:[#allocation5 + $0x50] sm:$0xff]
    %v113 = vld [vmem:[#allocation5 + $0x58] sm:$0xff]
    %v114 = vld [vmem:[#allocation5 + $0x60] sm:$0xff]
    %v115 = vld [vmem:[#allocation5 + $0x68] sm:$0xff]
    %v116 = vld [vmem:[#allocation5 + $0x70] sm:$0xff]
    %v117 = vld [vmem:[#allocation5 + $0x78] sm:$0xff]
    %v119 = vperm.slane %v101, 0
    %121 = vmatpush.msra.mxu0 %v117
    %122 = vmatpush.msra.mxu0 %v116
    %123 = vmatpush.msra.mxu0 %v115
    %124 = vmatpush.msra.mxu0 %v114
    %125 = vmatpush.msra.mxu0 %v113
    %126 = vmatpush.msra.mxu0 %v112
    %127 = vmatpush.msra.mxu0 %v111
    %128 = vmatpush.msra.mxu0 %v110
    %129 = vmatpush.msra.mxu0 %v109
    %130 = vmatpush.msra.mxu0 %v108
    %131 = vmatpush.msra.mxu0 %v107
    %132 = vmatpush.msra.mxu0 %v106
    %133 = vmatpush.msra.mxu0 %v105
    %134 = vmatpush.msra.mxu0 %v104
    %135 = vmatpush.msra.mxu0 %v103
    %136 = vmatpush.msra.mxu0 %v102
    %137 = vmatmul.f32.gmra.mxu0 %v100
    %v138 = vpop.f32.mrf.mxu0
    %v139 = vadd.f32 %v119, %v138
    %140 = vdwg.mxu0
    %v141 = vmul.f32 %v139, 0.70710677
    %v142 = vmul.f32 %v141, %v141
    %v143 = vmin.f32 16.0, %v142
    %v144 = vmul.f32 %v143, 2.1237322e-06
    %v145 = vadd.f32 %v144, 0.00028619796
    %v146 = vmul.f32 %v143, %v145
    %v147 = vadd.f32 %v146, 0.0036580483
    %v148 = vmul.f32 %v143, %v147
    %v149 = vadd.f32 %v148, 0.05243302
    %v150 = vmul.f32 %v143, %v149
    %v151 = vadd.f32 %v150, 0.18741608
    %v152 = vmul.f32 %v143, %v151
    %v153 = vadd.f32 %v152, 1.1283791
    %v154 = vmul.f32 %v141, %v153
    %v155 = vmul.f32 %v143, 3.8918573e-05
    %v156 = vadd.f32 %v155, 0.001143296
    %v157 = vmul.f32 %v143, %v156
    %v158 = vadd.f32 %v157, 0.014752088
    %v159 = vmul.f32 %v143, %v158
    %v160 = vadd.f32 %v159, 0.112945676
    %v161 = vmul.f32 %v143, %v160
    %v162 = vadd.f32 %v161, 0.4994258
    %v163 = vmul.f32 %v143, %v162
    %v164 = vadd.f32 %v163, 1.0
    %v165 = vrcp.pop %v164
    %v166 = vmul.f32 %v164, %v165
    %v167 = vsub.f32 1.0, %v166
    %v168 = vmul.f32 %v165, %v167
    %v169 = vadd.f32 %v165, %v168
    %vm170 = vweird.f32 %v164
    %vm171 = vweird.f32 %v165
    %vm172 = vmor %vm170, %vm171
    %v173 = vsel %vm172, %v165, %v169
    %v174 = vand.u32 2147483647, %v164
    %vm175 = vcmp.eq.f32.partialorder %v174, 8.507059e+37
    %v176 = vand.u32 %v164, 2147483648
    %v177 = vor.u32 1.1754944e-38, %v176
    %v178 = vsel %vm175, %v177, %v173
    %v179 = vmul.f32 %v154, %v178
    %v180 = vmin.f32 %v179, 1.0
    %v181 = vmax.f32 %v180, -1.0
    %v182 = vmul.f32 %v181, 0.5
    %v183 = vadd.f32 %v182, 0.5
    %v184 = vmul.f32 %v139, %v183
    %v185 = vld [vmem:[%s5 + $0x1] sm:$0x1]
    %v186 = vld [vmem:[#allocation7] sm:$0xff]
    %v187 = vld [vmem:[#allocation7 + $0x8] sm:$0xff]
    %v188 = vld [vmem:[#allocation7 + $0x10] sm:$0xff]
    %v189 = vld [vmem:[#allocation7 + $0x18] sm:$0xff]
    %v190 = vld [vmem:[#allocation7 + $0x20] sm:$0xff]
    %v191 = vld [vmem:[#allocation7 + $0x28] sm:$0xff]
    %v192 = vld [vmem:[#allocation7 + $0x30] sm:$0xff]
    %v193 = vld [vmem:[#allocation7 + $0x38] sm:$0xff]
    %v194 = vld [vmem:[#allocation7 + $0x40] sm:$0xff]
    %v195 = vld [vmem:[#allocation7 + $0x48] sm:$0xff]
    %v196 = vld [vmem:[#allocation7 + $0x50] sm:$0xff]
    %v197 = vld [vmem:[#allocation7 + $0x58] sm:$0xff]
    %v198 = vld [vmem:[#allocation7 + $0x60] sm:$0xff]
    %v199 = vld [vmem:[#allocation7 + $0x68] sm:$0xff]
    %v200 = vld [vmem:[#allocation7 + $0x70] sm:$0xff]
    %v201 = vld [vmem:[#allocation7 + $0x78] sm:$0xff]
    %v203 = vperm.slane %v185, 0
    %205 = vmatpush.msra.mxu0 %v201
    %206 = vmatpush.msra.mxu0 %v200
    %207 = vmatpush.msra.mxu0 %v199
    %208 = vmatpush.msra.mxu0 %v198
    %209 = vmatpush.msra.mxu0 %v197
    %210 = vmatpush.msra.mxu0 %v196
    %211 = vmatpush.msra.mxu0 %v195
    %212 = vmatpush.msra.mxu0 %v194
    %213 = vmatpush.msra.mxu0 %v193
    %214 = vmatpush.msra.mxu0 %v192
    %215 = vmatpush.msra.mxu0 %v191
    %216 = vmatpush.msra.mxu0 %v190
    %217 = vmatpush.msra.mxu0 %v189
    %218 = vmatpush.msra.mxu0 %v188
    %219 = vmatpush.msra.mxu0 %v187
    %220 = vmatpush.msra.mxu0 %v186
    %221 = vmatmul.f32.gmra.mxu0 %v184
    %v222 = vpop.f32.mrf.mxu0
    %v223 = vadd.f32 %v203, %v222
    %224 = vdwg.mxu0
    %v225 = vmul.f32 %v223, 0.70710677
    %v226 = vmul.f32 %v225, %v225
    %v227 = vmin.f32 16.0, %v226
    %v228 = vmul.f32 %v227, 2.1237322e-06
    %v229 = vadd.f32 %v228, 0.00028619796
    %v230 = vmul.f32 %v227, %v229
    %v231 = vadd.f32 %v230, 0.0036580483
    %v232 = vmul.f32 %v227, %v231
    %v233 = vadd.f32 %v232, 0.05243302
    %v234 = vmul.f32 %v227, %v233
    %v235 = vadd.f32 %v234, 0.18741608
    %v236 = vmul.f32 %v227, %v235
    %v237 = vadd.f32 %v236, 1.1283791
    %v238 = vmul.f32 %v225, %v237
    %v239 = vmul.f32 %v227, 3.8918573e-05
    %v240 = vadd.f32 %v239, 0.001143296
    %v241 = vmul.f32 %v227, %v240
    %v242 = vadd.f32 %v241, 0.014752088
    %v243 = vmul.f32 %v227, %v242
    %v244 = vadd.f32 %v243, 0.112945676
    %v245 = vmul.f32 %v227, %v244
    %v246 = vadd.f32 %v245, 0.4994258
    %v247 = vmul.f32 %v227, %v246
    %v248 = vadd.f32 %v247, 1.0
    %v249 = vrcp.pop %v248
    %v250 = vmul.f32 %v248, %v249
    %v251 = vsub.f32 1.0, %v250
    %v252 = vmul.f32 %v249, %v251
    %v253 = vadd.f32 %v249, %v252
    %vm254 = vweird.f32 %v248
    %vm255 = vweird.f32 %v249
    %vm256 = vmor %vm254, %vm255
    %v257 = vsel %vm256, %v249, %v253
    %v258 = vand.u32 2147483647, %v248
    %vm259 = vcmp.eq.f32.partialorder %v258, 8.507059e+37
    %v260 = vand.u32 %v248, 2147483648
    %v261 = vor.u32 1.1754944e-38, %v260
    %v262 = vsel %vm259, %v261, %v257
    %v263 = vmul.f32 %v238, %v262
    %v264 = vmin.f32 %v263, 1.0
    %v265 = vmax.f32 %v264, -1.0
    %v266 = vmul.f32 %v265, 0.5
    %v267 = vadd.f32 %v266, 0.5
    %v268 = vmul.f32 %v223, %v267
    %v269 = vld [vmem:[%s5 + $0x2] sm:$0x1]
    %v270 = vld [vmem:[#allocation8] sm:$0xff]
    %v271 = vld [vmem:[#allocation8 + $0x8] sm:$0xff]
    %v272 = vld [vmem:[#allocation8 + $0x10] sm:$0xff]
    %v273 = vld [vmem:[#allocation8 + $0x18] sm:$0xff]
    %v274 = vld [vmem:[#allocation8 + $0x20] sm:$0xff]
    %v275 = vld [vmem:[#allocation8 + $0x28] sm:$0xff]
    %v276 = vld [vmem:[#allocation8 + $0x30] sm:$0xff]
    %v277 = vld [vmem:[#allocation8 + $0x38] sm:$0xff]
    %v278 = vld [vmem:[#allocation8 + $0x40] sm:$0xff]
    %v279 = vld [vmem:[#allocation8 + $0x48] sm:$0xff]
    %v280 = vld [vmem:[#allocation8 + $0x50] sm:$0xff]
    %v281 = vld [vmem:[#allocation8 + $0x58] sm:$0xff]
    %v282 = vld [vmem:[#allocation8 + $0x60] sm:$0xff]
    %v283 = vld [vmem:[#allocation8 + $0x68] sm:$0xff]
    %v284 = vld [vmem:[#allocation8 + $0x70] sm:$0xff]
    %v285 = vld [vmem:[#allocation8 + $0x78] sm:$0xff]
    %v287 = vperm.slane %v269, 0
    %289 = vmatpush.msra.mxu0 %v285
    %290 = vmatpush.msra.mxu0 %v284
    %291 = vmatpush.msra.mxu0 %v283
    %292 = vmatpush.msra.mxu0 %v282
    %293 = vmatpush.msra.mxu0 %v281
    %294 = vmatpush.msra.mxu0 %v280
    %295 = vmatpush.msra.mxu0 %v279
    %296 = vmatpush.msra.mxu0 %v278
    %297 = vmatpush.msra.mxu0 %v277
    %298 = vmatpush.msra.mxu0 %v276
    %299 = vmatpush.msra.mxu0 %v275
    %300 = vmatpush.msra.mxu0 %v274
    %301 = vmatpush.msra.mxu0 %v273
    %302 = vmatpush.msra.mxu0 %v272
    %303 = vmatpush.msra.mxu0 %v271
    %304 = vmatpush.msra.mxu0 %v270
    %305 = vmatmul.f32.gmra.mxu0 %v268
    %v306 = vpop.f32.mrf.mxu0
    %v307 = vadd.f32 %v287, %v306
    %308 = vdwg.mxu0
    %v309 = vmul.f32 %v307, 0.70710677
    %v310 = vmul.f32 %v309, %v309
    %v311 = vmin.f32 16.0, %v310
    %v312 = vmul.f32 %v311, 2.1237322e-06
    %v313 = vadd.f32 %v312, 0.00028619796
    %v314 = vmul.f32 %v311, %v313
    %v315 = vadd.f32 %v314, 0.0036580483
    %v316 = vmul.f32 %v311, %v315
    %v317 = vadd.f32 %v316, 0.05243302
    %v318 = vmul.f32 %v311, %v317
    %v319 = vadd.f32 %v318, 0.18741608
    %v320 = vmul.f32 %v311, %v319
    %v321 = vadd.f32 %v320, 1.1283791
    %v322 = vmul.f32 %v309, %v321
    %v323 = vmul.f32 %v311, 3.8918573e-05
    %v324 = vadd.f32 %v323, 0.001143296
    %v325 = vmul.f32 %v311, %v324
    %v326 = vadd.f32 %v325, 0.014752088
    %v327 = vmul.f32 %v311, %v326
    %v328 = vadd.f32 %v327, 0.112945676
    %v329 = vmul.f32 %v311, %v328
    %v330 = vadd.f32 %v329, 0.4994258
    %v331 = vmul.f32 %v311, %v330
    %v332 = vadd.f32 %v331, 1.0
    %v333 = vrcp.pop %v332
    %v334 = vmul.f32 %v332, %v333
    %v335 = vsub.f32 1.0, %v334
    %v336 = vmul.f32 %v333, %v335
    %v337 = vadd.f32 %v333, %v336
    %vm338 = vweird.f32 %v332
    %vm339 = vweird.f32 %v333
    %vm340 = vmor %vm338, %vm339
    %v341 = vsel %vm340, %v333, %v337
    %v342 = vand.u32 2147483647, %v332
    %vm343 = vcmp.eq.f32.partialorder %v342, 8.507059e+37
    %v344 = vand.u32 %v332, 2147483648
    %v345 = vor.u32 1.1754944e-38, %v344
    %v346 = vsel %vm343, %v345, %v341
    %v347 = vmul.f32 %v322, %v346
    %v348 = vmin.f32 %v347, 1.0
    %v349 = vmax.f32 %v348, -1.0
    %v350 = vmul.f32 %v349, 0.5
    %v351 = vadd.f32 %v350, 0.5
    %v352 = vmul.f32 %v307, %v351
    %v353 = vld [vmem:[%s5 + $0x3] sm:$0x1]
    %v354 = vld [vmem:[#allocation10] sm:$0xff]
    %v355 = vld [vmem:[#allocation10 + $0x8] sm:$0xff]
    %v356 = vld [vmem:[#allocation10 + $0x10] sm:$0xff]
    %v357 = vld [vmem:[#allocation10 + $0x18] sm:$0xff]
    %v358 = vld [vmem:[#allocation10 + $0x20] sm:$0xff]
    %v359 = vld [vmem:[#allocation10 + $0x28] sm:$0xff]
    %v360 = vld [vmem:[#allocation10 + $0x30] sm:$0xff]
    %v361 = vld [vmem:[#allocation10 + $0x38] sm:$0xff]
    %v362 = vld [vmem:[#allocation10 + $0x40] sm:$0xff]
    %v363 = vld [vmem:[#allocation10 + $0x48] sm:$0xff]
    %v364 = vld [vmem:[#allocation10 + $0x50] sm:$0xff]
    %v365 = vld [vmem:[#allocation10 + $0x58] sm:$0xff]
    %v366 = vld [vmem:[#allocation10 + $0x60] sm:$0xff]
    %v367 = vld [vmem:[#allocation10 + $0x68] sm:$0xff]
    %v368 = vld [vmem:[#allocation10 + $0x70] sm:$0xff]
    %v369 = vld [vmem:[#allocation10 + $0x78] sm:$0xff]
    %v371 = vperm.slane %v353, 0
    %373 = vmatpush.msra.mxu0 %v369
    %374 = vmatpush.msra.mxu0 %v368
    %375 = vmatpush.msra.mxu0 %v367
    %376 = vmatpush.msra.mxu0 %v366
    %377 = vmatpush.msra.mxu0 %v365
    %378 = vmatpush.msra.mxu0 %v364
    %379 = vmatpush.msra.mxu0 %v363
    %380 = vmatpush.msra.mxu0 %v362
    %381 = vmatpush.msra.mxu0 %v361
    %382 = vmatpush.msra.mxu0 %v360
    %383 = vmatpush.msra.mxu0 %v359
    %384 = vmatpush.msra.mxu0 %v358
    %385 = vmatpush.msra.mxu0 %v357
    %386 = vmatpush.msra.mxu0 %v356
    %387 = vmatpush.msra.mxu0 %v355
    %388 = vmatpush.msra.mxu0 %v354
    %389 = vmatmul.f32.gmra.mxu0 %v352
    %v390 = vpop.f32.mrf.mxu0
    %v391 = vadd.f32 %v371, %v390
    %392 = vdwg.mxu0
    %393 = vst [vmem:[#allocation11] sm:$0xff] %v391
    // Predicated region
    $region46: #{tpu_custom_call.1} parent=1 // pred_check
      _
    $region47: #{tpu_custom_call.1} parent=1 // pred_check_branch
      %395 = sbr.rel (0) target = $region49
    $region48: #{tpu_custom_call.1} parent=1 // pred_region
      %397 = vsyncadd [#allocation4], 0
      %s399 = sshll.u32 [#allocation11], 4
      %s400 = int_to_ptr.vmem [resolvable:$true] %s399
      %s401 = sshll.u32 %s6, 4
      %s402 = int_to_ptr.hbm [resolvable:$true] %s401
      %404 = dma.vmem_to_hbm [thread:$0]  %s400, 128, %s402, [#allocation4]
    $region49: #{tpu_custom_call.1} parent=1 // pred_fallthru
      _
    // Predicated region
    $region50: #{tpu_custom_call.1} parent=1 // pred_check
      _
    $region51: #{tpu_custom_call.1} parent=1 // pred_check_branch
      %406 = sbr.rel (0) target = $region53
    $region52: #{tpu_custom_call.1} parent=1 // pred_region
      %408 = dma.done [#allocation4], 128
    $region53: #{tpu_custom_call.1} parent=1 // pred_fallthru
      _
    %409 = vsyncpa [#allocation3], 1
    %410 = vsyncpa [#allocation6], 1
    %411 = vsyncpa [#allocation9], 1
    %412 = vsyncpa [#allocation4], 1

// kernel: tpu_custom_call.1
$region0: #{tpu_custom_call.1}
  #allocation0 [shape = 'u32[]', space=smem, size = 0x4, offset = 0x4, fixed_abs, tag = 'smem constant byte address 0x4 - core index']
  #allocation1 [shape = 'u32[72,128]{1,0:T(1,128)}', space=vmem, size = 0x9000, scoped, tag = 'internal scratch']
  %s0 = inlined_call_operand.hbm [shape: f32[8,128], index: 0, kind: input, shape index: {}]
  %s1 = inlined_call_operand.hbm [shape: f32[128,128], index: 1, kind: input, shape index: {}]
  %s2 = inlined_call_operand.hbm [shape: f32[128,128], index: 2, kind: input, shape index: {}]
  %s3 = inlined_call_operand.hbm [shape: f32[128,128], index: 3, kind: input, shape index: {}]
  %s4 = inlined_call_operand.hbm [shape: f32[128,128], index: 4, kind: input, shape index: {}]
  %s5 = inlined_call_operand.vmem [shape: f32[1,512], index: 5, kind: input, shape index: {}]
  %s6 = inlined_call_operand.hbm [shape: f32[8,128], index: 6, kind: output, shape index: {}]
  %s7 = sld [smem:[#allocation0]]
  $region54: #{tpu_custom_call.1} parent=0
    _
  %s9 = ssub.s32 1, %s7
  %s10 = scalar_select 0, %s9, %s7
  $region1: #{tpu_custom_call.1} parent=0
    #allocation2 [shape = 'u8[4096]{0}', space=vmem, size = 0x1000, scoped, tag = 'input window, operand 0, single buffered']
    #allocation3 [shape = 's32[1]{0}', space=sflag, size = 0x4, scoped, tag = 'scoped memory for tpu_custom_call.1']
    #allocation4 [shape = 's32[1]{0}', space=sflag, size = 0x4, scoped, tag = 'scoped memory for tpu_custom_call.1']
    #allocation5 [shape = 'u8[65536]{0}', space=vmem, size = 0x10000, scoped, tag = 'input window, operand 1, single buffered']
    #allocation6 [shape = 's32[1]{0}', space=sflag, size = 0x4, scoped, tag = 'scoped memory for tpu_custom_call.1']
    #allocation7 [shape = 'u8[65536]{0}', space=vmem, size = 0x10000, scoped, tag = 'input window, operand 2, single buffered']
    #allocation8 [shape = 'u8[65536]{0}', space=vmem, size = 0x10000, scoped, tag = 'input window, operand 3, single buffered']
    #allocation9 [shape = 's32[1]{0}', space=sflag, size = 0x4, scoped, tag = 'scoped memory for tpu_custom_call.1']
    #allocation10 [shape = 'u8[65536]{0}', space=vmem, size = 0x10000, scoped, tag = 'input window, operand 4, single buffered']
    #allocation11 [shape = 'u8[4096]{0}', space=vmem, size = 0x1000, scoped, tag = 'output window, operand 0, single buffered']
    %11 = vsyncpa [#allocation3], 0
    %12 = vsyncpa [#allocation6], 0
    %13 = vsyncpa [#allocation9], 0
    %14 = vsyncpa [#allocation4], 0
    // Predicated region
    $region2: #{tpu_custom_call.1} parent=1 // pred_check
      _
    $region3: #{tpu_custom_call.1} parent=1 // pred_check_branch
      %16 = sbr.rel (0) target = $region5
    $region4: #{tpu_custom_call.1} parent=1 // pred_region
      %18 = vsyncadd [#allocation3], 0
      %s20 = sshll.u32 %s0, 4
      %s21 = int_to_ptr.hbm [resolvable:$true] %s20
      %s22 = sshll.u32 [#allocation2], 4
      %s23 = int_to_ptr.vmem [resolvable:$true] %s22
      %25 = dma.hbm_to_vmem [thread:$0]  %s21, 128, %s23, [#allocation3]
    $region5: #{tpu_custom_call.1} parent=1 // pred_fallthru
      _
    // Predicated region
    $region6: #{tpu_custom_call.1} parent=1 // pred_check
      _
    $region7: #{tpu_custom_call.1} parent=1 // pred_check_branch
      %27 = sbr.rel (0) target = $region9
    $region8: #{tpu_custom_call.1} parent=1 // pred_region
      %29 = vsyncadd [#allocation6], 0
      %s30 = sshll.u32 %s1, 4
      %s31 = int_to_ptr.hbm [resolvable:$true] %s30
      %s32 = sshll.u32 [#allocation5], 4
      %s33 = int_to_ptr.vmem [resolvable:$true] %s32
      %38 = dma.hbm_to_vmem [thread:$0]  %s31, 2048, %s33, [#allocation6], 128, 128, 8
    $region9: #{tpu_custom_call.1} parent=1 // pred_fallthru
      _
    // Predicated region
    $region10: #{tpu_custom_call.1} parent=1 // pred_check
      _
    $region11: #{tpu_custom_call.1} parent=1 // pred_check_branch
      %40 = sbr.rel (0) target = $region13
    $region12: #{tpu_custom_call.1} parent=1 // pred_region
      %42 = vsyncadd [#allocation6], 0
      %s43 = sshll.u32 %s2, 4
      %s44 = int_to_ptr.hbm [resolvable:$true] %s43
      %s45 = sshll.u32 [#allocation7], 4
      %s46 = int_to_ptr.vmem [resolvable:$true] %s45
      %51 = dma.hbm_to_vmem [thread:$0]  %s44, 2048, %s46, [#allocation6], 128, 128, 8
    $region13: #{tpu_custom_call.1} parent=1 // pred_fallthru
      _
    // Predicated region
    $region14: #{tpu_custom_call.1} parent=1 // pred_check
      _
    $region15: #{tpu_custom_call.1} parent=1 // pred_check_branch
      %53 = sbr.rel (0) target = $region17
    $region16: #{tpu_custom_call.1} parent=1 // pred_region
      %55 = vsyncadd [#allocation9], 0
      %s56 = sshll.u32 %s3, 4
      %s57 = int_to_ptr.hbm [resolvable:$true] %s56
      %s58 = sshll.u32 [#allocation8], 4
      %s59 = int_to_ptr.vmem [resolvable:$true] %s58
      %64 = dma.hbm_to_vmem [thread:$0]  %s57, 2048, %s59, [#allocation9], 128, 128, 8
    $region17: #{tpu_custom_call.1} parent=1 // pred_fallthru
      _
    // Predicated region
    $region18: #{tpu_custom_call.1} parent=1 // pred_check
      _
    $region19: #{tpu_custom_call.1} parent=1 // pred_check_branch
      %66 = sbr.rel (0) target = $region21
    $region20: #{tpu_custom_call.1} parent=1 // pred_region
      %68 = vsyncadd [#allocation9], 0
      %s69 = sshll.u32 %s4, 4
      %s70 = int_to_ptr.hbm [resolvable:$true] %s69
      %s71 = sshll.u32 [#allocation10], 4
      %s72 = int_to_ptr.vmem [resolvable:$true] %s71
      %77 = dma.hbm_to_vmem [thread:$0]  %s70, 2048, %s72, [#allocation9], 128, 128, 8
    $region21: #{tpu_custom_call.1} parent=1 // pred_fallthru
      _
    // Predicated region
    $region22: #{tpu_custom_call.1} parent=1 // pred_check
      _
    $region23: #{tpu_custom_call.1} parent=1 // pred_check_branch
      %79 = sbr.rel (0) target = $region25
    $region24: #{tpu_custom_call.1} parent=1 // pred_region
      _
    $region25: #{tpu_custom_call.1} parent=1 // pred_fallthru
      _
    // Predicated region
    $region26: #{tpu_custom_call.1} parent=1 // pred_check
      _
    $region27: #{tpu_custom_call.1} parent=1 // pred_check_branch
      %81 = sbr.rel (0) target = $region29
    $region28: #{tpu_custom_call.1} parent=1 // pred_region
      %83 = dma.done [#allocation3], 128
    $region29: #{tpu_custom_call.1} parent=1 // pred_fallthru
      _
    // Predicated region
    $region30: #{tpu_custom_call.1} parent=1 // pred_check
      _
    $region31: #{tpu_custom_call.1} parent=1 // pred_check_branch
      %85 = sbr.rel (0) target = $region33
    $region32: #{tpu_custom_call.1} parent=1 // pred_region
      %87 = dma.done [#allocation6], 2048
    $region33: #{tpu_custom_call.1} parent=1 // pred_fallthru
      _
    // Predicated region
    $region34: #{tpu_custom_call.1} parent=1 // pred_check
      _
    $region35: #{tpu_custom_call.1} parent=1 // pred_check_branch
      %89 = sbr.rel (0) target = $region37
    $region36: #{tpu_custom_call.1} parent=1 // pred_region
      %91 = dma.done [#allocation6], 2048
    $region37: #{tpu_custom_call.1} parent=1 // pred_fallthru
      _
    // Predicated region
    $region38: #{tpu_custom_call.1} parent=1 // pred_check
      _
    $region39: #{tpu_custom_call.1} parent=1 // pred_check_branch
      %93 = sbr.rel (0) target = $region41
    $region40: #{tpu_custom_call.1} parent=1 // pred_region
      %95 = dma.done [#allocation9], 2048
    $region41: #{tpu_custom_call.1} parent=1 // pred_fallthru
      _
    // Predicated region
    $region42: #{tpu_custom_call.1} parent=1 // pred_check
      _
    $region43: #{tpu_custom_call.1} parent=1 // pred_check_branch
      %97 = sbr.rel (0) target = $region45
    $region44: #{tpu_custom_call.1} parent=1 // pred_region
      %99 = dma.done [#allocation9], 2048
    $region45: #{tpu_custom_call.1} parent=1 // pred_fallthru
      _
    %v100 = vld [vmem:[#allocation2] sm:$0xff]
    %v101 = vld [vmem:[%s5] sm:$0x1]
    %v102 = vld [vmem:[#allocation5] sm:$0xff]
    %v103 = vld [vmem:[#allocation5 + $0x8] sm:$0xff]
    %v104 = vld [vmem:[#allocation5 + $0x10] sm:$0xff]
    %v105 = vld [vmem:[#allocation5 + $0x18] sm:$0xff]
    %v106 = vld [vmem:[#allocation5 + $0x20] sm:$0xff]
    %v107 = vld [vmem:[#allocation5 + $0x28] sm:$0xff]
    %v108 = vld [vmem:[#allocation5 + $0x30] sm:$0xff]
    %v109 = vld [vmem:[#allocation5 + $0x38] sm:$0xff]
    %v110 = vld [vmem:[#allocation5 + $0x40] sm:$0xff]
    %v111 = vld [vmem:[#allocation5 + $0x48] sm:$0xff]
    %v112 = vld [vmem:[#allocation5 + $0x50] sm:$0xff]
    %v113 = vld [vmem:[#allocation5 + $0x58] sm:$0xff]
    %v114 = vld [vmem:[#allocation5 + $0x60] sm:$0xff]
    %v115 = vld [vmem:[#allocation5 + $0x68] sm:$0xff]
    %v116 = vld [vmem:[#allocation5 + $0x70] sm:$0xff]
    %v117 = vld [vmem:[#allocation5 + $0x78] sm:$0xff]
    %v119 = vperm.slane %v101, 0
    %121 = vmatpush.msra.mxu0 %v117
    %122 = vmatpush.msra.mxu0 %v116
    %123 = vmatpush.msra.mxu0 %v115
    %124 = vmatpush.msra.mxu0 %v114
    %125 = vmatpush.msra.mxu0 %v113
    %126 = vmatpush.msra.mxu0 %v112
    %127 = vmatpush.msra.mxu0 %v111
    %128 = vmatpush.msra.mxu0 %v110
    %129 = vmatpush.msra.mxu0 %v109
    %130 = vmatpush.msra.mxu0 %v108
    %131 = vmatpush.msra.mxu0 %v107
    %132 = vmatpush.msra.mxu0 %v106
    %133 = vmatpush.msra.mxu0 %v105
    %134 = vmatpush.msra.mxu0 %v104
    %135 = vmatpush.msra.mxu0 %v103
    %136 = vmatpush.msra.mxu0 %v102
    %137 = vmatmul.f32.gmra.mxu0 %v100
    %v138 = vpop.f32.mrf.mxu0
    %v139 = vadd.f32 %v119, %v138
    %140 = vdwg.mxu0
    %v141 = vmul.f32 %v139, 0.70710677
    %v142 = vmul.f32 %v141, %v141
    %v143 = vmin.f32 16.0, %v142
    %v144 = vmul.f32 %v143, 2.1237322e-06
    %v145 = vadd.f32 %v144, 0.00028619796
    %v146 = vmul.f32 %v143, %v145
    %v147 = vadd.f32 %v146, 0.0036580483
    %v148 = vmul.f32 %v143, %v147
    %v149 = vadd.f32 %v148, 0.05243302
    %v150 = vmul.f32 %v143, %v149
    %v151 = vadd.f32 %v150, 0.18741608
    %v152 = vmul.f32 %v143, %v151
    %v153 = vadd.f32 %v152, 1.1283791
    %v154 = vmul.f32 %v141, %v153
    %v155 = vmul.f32 %v143, 3.8918573e-05
    %v156 = vadd.f32 %v155, 0.001143296
    %v157 = vmul.f32 %v143, %v156
    %v158 = vadd.f32 %v157, 0.014752088
    %v159 = vmul.f32 %v143, %v158
    %v160 = vadd.f32 %v159, 0.112945676
    %v161 = vmul.f32 %v143, %v160
    %v162 = vadd.f32 %v161, 0.4994258
    %v163 = vmul.f32 %v143, %v162
    %v164 = vadd.f32 %v163, 1.0
    %v165 = vrcp.pop %v164
    %v166 = vmul.f32 %v164, %v165
    %v167 = vsub.f32 1.0, %v166
    %v168 = vmul.f32 %v165, %v167
    %v169 = vadd.f32 %v165, %v168
    %vm170 = vweird.f32 %v164
    %vm171 = vweird.f32 %v165
    %vm172 = vmor %vm170, %vm171
    %v173 = vsel %vm172, %v165, %v169
    %v174 = vand.u32 2147483647, %v164
    %vm175 = vcmp.eq.f32.partialorder %v174, 8.507059e+37
    %v176 = vand.u32 %v164, 2147483648
    %v177 = vor.u32 1.1754944e-38, %v176
    %v178 = vsel %vm175, %v177, %v173
    %v179 = vmul.f32 %v154, %v178
    %v180 = vmin.f32 %v179, 1.0
    %v181 = vmax.f32 %v180, -1.0
    %v182 = vmul.f32 %v181, 0.5
    %v183 = vadd.f32 %v182, 0.5
    %v184 = vmul.f32 %v139, %v183
    %v185 = vld [vmem:[%s5 + $0x1] sm:$0x1]
    %v186 = vld [vmem:[#allocation7] sm:$0xff]
    %v187 = vld [vmem:[#allocation7 + $0x8] sm:$0xff]
    %v188 = vld [vmem:[#allocation7 + $0x10] sm:$0xff]
    %v189 = vld [vmem:[#allocation7 + $0x18] sm:$0xff]
    %v190 = vld [vmem:[#allocation7 + $0x20] sm:$0xff]
    %v191 = vld [vmem:[#allocation7 + $0x28] sm:$0xff]
    %v192 = vld [vmem:[#allocation7 + $0x30] sm:$0xff]
    %v193 = vld [vmem:[#allocation7 + $0x38] sm:$0xff]
    %v194 = vld [vmem:[#allocation7 + $0x40] sm:$0xff]
    %v195 = vld [vmem:[#allocation7 + $0x48] sm:$0xff]
    %v196 = vld [vmem:[#allocation7 + $0x50] sm:$0xff]
    %v197 = vld [vmem:[#allocation7 + $0x58] sm:$0xff]
    %v198 = vld [vmem:[#allocation7 + $0x60] sm:$0xff]
    %v199 = vld [vmem:[#allocation7 + $0x68] sm:$0xff]
    %v200 = vld [vmem:[#allocation7 + $0x70] sm:$0xff]
    %v201 = vld [vmem:[#allocation7 + $0x78] sm:$0xff]
    %v203 = vperm.slane %v185, 0
    %205 = vmatpush.msra.mxu0 %v201
    %206 = vmatpush.msra.mxu0 %v200
    %207 = vmatpush.msra.mxu0 %v199
    %208 = vmatpush.msra.mxu0 %v198
    %209 = vmatpush.msra.mxu0 %v197
    %210 = vmatpush.msra.mxu0 %v196
    %211 = vmatpush.msra.mxu0 %v195
    %212 = vmatpush.msra.mxu0 %v194
    %213 = vmatpush.msra.mxu0 %v193
    %214 = vmatpush.msra.mxu0 %v192
    %215 = vmatpush.msra.mxu0 %v191
    %216 = vmatpush.msra.mxu0 %v190
    %217 = vmatpush.msra.mxu0 %v189
    %218 = vmatpush.msra.mxu0 %v188
    %219 = vmatpush.msra.mxu0 %v187
    %220 = vmatpush.msra.mxu0 %v186
    %221 = vmatmul.f32.gmra.mxu0 %v184
    %v222 = vpop.f32.mrf.mxu0
    %v223 = vadd.f32 %v203, %v222
    %224 = vdwg.mxu0
    %v225 = vmul.f32 %v223, 0.70710677
    %v226 = vmul.f32 %v225, %v225
    %v227 = vmin.f32 16.0, %v226
    %v228 = vmul.f32 %v227, 2.1237322e-06
    %v229 = vadd.f32 %v228, 0.00028619796
    %v230 = vmul.f32 %v227, %v229
    %v231 = vadd.f32 %v230, 0.0036580483
    %v232 = vmul.f32 %v227, %v231
    %v233 = vadd.f32 %v232, 0.05243302
    %v234 = vmul.f32 %v227, %v233
    %v235 = vadd.f32 %v234, 0.18741608
    %v236 = vmul.f32 %v227, %v235
    %v237 = vadd.f32 %v236, 1.1283791
    %v238 = vmul.f32 %v225, %v237
    %v239 = vmul.f32 %v227, 3.8918573e-05
    %v240 = vadd.f32 %v239, 0.001143296
    %v241 = vmul.f32 %v227, %v240
    %v242 = vadd.f32 %v241, 0.014752088
    %v243 = vmul.f32 %v227, %v242
    %v244 = vadd.f32 %v243, 0.112945676
    %v245 = vmul.f32 %v227, %v244
    %v246 = vadd.f32 %v245, 0.4994258
    %v247 = vmul.f32 %v227, %v246
    %v248 = vadd.f32 %v247, 1.0
    %v249 = vrcp.pop %v248
    %v250 = vmul.f32 %v248, %v249
    %v251 = vsub.f32 1.0, %v250
    %v252 = vmul.f32 %v249, %v251
    %v253 = vadd.f32 %v249, %v252
    %vm254 = vweird.f32 %v248
    %vm255 = vweird.f32 %v249
    %vm256 = vmor %vm254, %vm255
    %v257 = vsel %vm256, %v249, %v253
    %v258 = vand.u32 2147483647, %v248
    %vm259 = vcmp.eq.f32.partialorder %v258, 8.507059e+37
    %v260 = vand.u32 %v248, 2147483648
    %v261 = vor.u32 1.1754944e-38, %v260
    %v262 = vsel %vm259, %v261, %v257
    %v263 = vmul.f32 %v238, %v262
    %v264 = vmin.f32 %v263, 1.0
    %v265 = vmax.f32 %v264, -1.0
    %v266 = vmul.f32 %v265, 0.5
    %v267 = vadd.f32 %v266, 0.5
    %v268 = vmul.f32 %v223, %v267
    %v269 = vld [vmem:[%s5 + $0x2] sm:$0x1]
    %v270 = vld [vmem:[#allocation8] sm:$0xff]
    %v271 = vld [vmem:[#allocation8 + $0x8] sm:$0xff]
    %v272 = vld [vmem:[#allocation8 + $0x10] sm:$0xff]
    %v273 = vld [vmem:[#allocation8 + $0x18] sm:$0xff]
    %v274 = vld [vmem:[#allocation8 + $0x20] sm:$0xff]
    %v275 = vld [vmem:[#allocation8 + $0x28] sm:$0xff]
    %v276 = vld [vmem:[#allocation8 + $0x30] sm:$0xff]
    %v277 = vld [vmem:[#allocation8 + $0x38] sm:$0xff]
    %v278 = vld [vmem:[#allocation8 + $0x40] sm:$0xff]
    %v279 = vld [vmem:[#allocation8 + $0x48] sm:$0xff]
    %v280 = vld [vmem:[#allocation8 + $0x50] sm:$0xff]
    %v281 = vld [vmem:[#allocation8 + $0x58] sm:$0xff]
    %v282 = vld [vmem:[#allocation8 + $0x60] sm:$0xff]
    %v283 = vld [vmem:[#allocation8 + $0x68] sm:$0xff]
    %v284 = vld [vmem:[#allocation8 + $0x70] sm:$0xff]
    %v285 = vld [vmem:[#allocation8 + $0x78] sm:$0xff]
    %v287 = vperm.slane %v269, 0
    %289 = vmatpush.msra.mxu0 %v285
    %290 = vmatpush.msra.mxu0 %v284
    %291 = vmatpush.msra.mxu0 %v283
    %292 = vmatpush.msra.mxu0 %v282
    %293 = vmatpush.msra.mxu0 %v281
    %294 = vmatpush.msra.mxu0 %v280
    %295 = vmatpush.msra.mxu0 %v279
    %296 = vmatpush.msra.mxu0 %v278
    %297 = vmatpush.msra.mxu0 %v277
    %298 = vmatpush.msra.mxu0 %v276
    %299 = vmatpush.msra.mxu0 %v275
    %300 = vmatpush.msra.mxu0 %v274
    %301 = vmatpush.msra.mxu0 %v273
    %302 = vmatpush.msra.mxu0 %v272
    %303 = vmatpush.msra.mxu0 %v271
    %304 = vmatpush.msra.mxu0 %v270
    %305 = vmatmul.f32.gmra.mxu0 %v268
    %v306 = vpop.f32.mrf.mxu0
    %v307 = vadd.f32 %v287, %v306
    %308 = vdwg.mxu0
    %v309 = vmul.f32 %v307, 0.70710677
    %v310 = vmul.f32 %v309, %v309
    %v311 = vmin.f32 16.0, %v310
    %v312 = vmul.f32 %v311, 2.1237322e-06
    %v313 = vadd.f32 %v312, 0.00028619796
    %v314 = vmul.f32 %v311, %v313
    %v315 = vadd.f32 %v314, 0.0036580483
    %v316 = vmul.f32 %v311, %v315
    %v317 = vadd.f32 %v316, 0.05243302
    %v318 = vmul.f32 %v311, %v317
    %v319 = vadd.f32 %v318, 0.18741608
    %v320 = vmul.f32 %v311, %v319
    %v321 = vadd.f32 %v320, 1.1283791
    %v322 = vmul.f32 %v309, %v321
    %v323 = vmul.f32 %v311, 3.8918573e-05
    %v324 = vadd.f32 %v323, 0.001143296
    %v325 = vmul.f32 %v311, %v324
    %v326 = vadd.f32 %v325, 0.014752088
    %v327 = vmul.f32 %v311, %v326
    %v328 = vadd.f32 %v327, 0.112945676
    %v329 = vmul.f32 %v311, %v328
    %v330 = vadd.f32 %v329, 0.4994258
    %v331 = vmul.f32 %v311, %v330
    %v332 = vadd.f32 %v331, 1.0
    %v333 = vrcp.pop %v332
    %v334 = vmul.f32 %v332, %v333
    %v335 = vsub.f32 1.0, %v334
    %v336 = vmul.f32 %v333, %v335
    %v337 = vadd.f32 %v333, %v336
    %vm338 = vweird.f32 %v332
    %vm339 = vweird.f32 %v333
    %vm340 = vmor %vm338, %vm339
    %v341 = vsel %vm340, %v333, %v337
    %v342 = vand.u32 2147483647, %v332
    %vm343 = vcmp.eq.f32.partialorder %v342, 8.507059e+37
    %v344 = vand.u32 %v332, 2147483648
    %v345 = vor.u32 1.1754944e-38, %v344
    %v346 = vsel %vm343, %v345, %v341
    %v347 = vmul.f32 %v322, %v346
    %v348 = vmin.f32 %v347, 1.0
    %v349 = vmax.f32 %v348, -1.0
    %v350 = vmul.f32 %v349, 0.5
    %v351 = vadd.f32 %v350, 0.5
    %v352 = vmul.f32 %v307, %v351
    %v353 = vld [vmem:[%s5 + $0x3] sm:$0x1]
    %v354 = vld [vmem:[#allocation10] sm:$0xff]
    %v355 = vld [vmem:[#allocation10 + $0x8] sm:$0xff]
    %v356 = vld [vmem:[#allocation10 + $0x10] sm:$0xff]
    %v357 = vld [vmem:[#allocation10 + $0x18] sm:$0xff]
    %v358 = vld [vmem:[#allocation10 + $0x20] sm:$0xff]
    %v359 = vld [vmem:[#allocation10 + $0x28] sm:$0xff]
    %v360 = vld [vmem:[#allocation10 + $0x30] sm:$0xff]
    %v361 = vld [vmem:[#allocation10 + $0x38] sm:$0xff]
    %v362 = vld [vmem:[#allocation10 + $0x40] sm:$0xff]
    %v363 = vld [vmem:[#allocation10 + $0x48] sm:$0xff]
    %v364 = vld [vmem:[#allocation10 + $0x50] sm:$0xff]
    %v365 = vld [vmem:[#allocation10 + $0x58] sm:$0xff]
    %v366 = vld [vmem:[#allocation10 + $0x60] sm:$0xff]
    %v367 = vld [vmem:[#allocation10 + $0x68] sm:$0xff]
    %v368 = vld [vmem:[#allocation10 + $0x70] sm:$0xff]
    %v369 = vld [vmem:[#allocation10 + $0x78] sm:$0xff]
    %v371 = vperm.slane %v353, 0
    %373 = vmatpush.msra.mxu0 %v369
    %374 = vmatpush.msra.mxu0 %v368
    %375 = vmatpush.msra.mxu0 %v367
    %376 = vmatpush.msra.mxu0 %v366
    %377 = vmatpush.msra.mxu0 %v365
    %378 = vmatpush.msra.mxu0 %v364
    %379 = vmatpush.msra.mxu0 %v363
    %380 = vmatpush.msra.mxu0 %v362
    %381 = vmatpush.msra.mxu0 %v361
    %382 = vmatpush.msra.mxu0 %v360
    %383 = vmatpush.msra.mxu0 %v359
    %384 = vmatpush.msra.mxu0 %v358
    %385 = vmatpush.msra.mxu0 %v357
    %386 = vmatpush.msra.mxu0 %v356
    %387 = vmatpush.msra.mxu0 %v355
    %388 = vmatpush.msra.mxu0 %v354
    %389 = vmatmul.f32.gmra.mxu0 %v352
    %v390 = vpop.f32.mrf.mxu0
    %v391 = vadd.f32 %v371, %v390
    %392 = vdwg.mxu0
    %393 = vst [vmem:[#allocation11] sm:$0xff] %v391
    // Predicated region
    $region46: #{tpu_custom_call.1} parent=1 // pred_check
      _
    $region47: #{tpu_custom_call.1} parent=1 // pred_check_branch
      %395 = sbr.rel (0) target = $region49
    $region48: #{tpu_custom_call.1} parent=1 // pred_region
      %397 = vsyncadd [#allocation4], 0
      %s399 = sshll.u32 [#allocation11], 4
      %s400 = int_to_ptr.vmem [resolvable:$true] %s399
      %s401 = sshll.u32 %s6, 4
      %s402 = int_to_ptr.hbm [resolvable:$true] %s401
      %404 = dma.vmem_to_hbm [thread:$0]  %s400, 128, %s402, [#allocation4]
    $region49: #{tpu_custom_call.1} parent=1 // pred_fallthru
      _
    // Predicated region
    $region50: #{tpu_custom_call.1} parent=1 // pred_check
      _
    $region51: #{tpu_custom_call.1} parent=1 // pred_check_branch
      %406 = sbr.rel (0) target = $region53
    $region52: #{tpu_custom_call.1} parent=1 // pred_region
      %408 = dma.done [#allocation4], 128
    $region53: #{tpu_custom_call.1} parent=1 // pred_fallthru
      _
    %409 = vsyncpa [#allocation3], 1
    %410 = vsyncpa [#allocation6], 1
    %411 = vsyncpa [#allocation9], 1
    %412 = vsyncpa [#allocation4], 1

// kernel: tpu_custom_call.1
$region0: #{tpu_custom_call.1}
  #allocation0 [shape = 'u32[]', space=smem, size = 0x4, offset = 0x4, fixed_abs, tag = 'smem constant byte address 0x4 - core index']
  #allocation1 [shape = 'u32[72,128]{1,0:T(1,128)}', space=vmem, size = 0x9000, scoped, tag = 'internal scratch']
  #allocation2 [shape = 'f32[8,128]{1,0:T(8,128)}', space=vmem, size = 0x1000, scoped, tag = 'scratch operand']
  %s0 = inlined_call_operand.hbm [shape: f32[8,128], index: 0, kind: input, shape index: {}]
  %s1 = inlined_call_operand.hbm [shape: f32[128,128], index: 1, kind: input, shape index: {}]
  %s2 = inlined_call_operand.vmem [shape: f32[1,128], index: 2, kind: input, shape index: {}]
  %s3 = inlined_call_operand.hbm [shape: f32[8,128], index: 3, kind: output, shape index: {}]
  %s4 = sld [smem:[#allocation0]]
  $region38: #{tpu_custom_call.1} parent=0
    _
  %s6 = ssub.s32 1, %s4
  %s7 = scalar_select 0, %s6, %s4
  $region1: #{tpu_custom_call.1} parent=0
    #allocation3 [shape = 'u8[4096]{0}', space=vmem, size = 0x1000, scoped, tag = 'input window, operand 0, single buffered']
    #allocation4 [shape = 's32[1]{0}', space=sflag, size = 0x4, scoped, tag = 'scoped memory for tpu_custom_call.1']
    #allocation5 [shape = 's32[1]{0}', space=sflag, size = 0x4, scoped, tag = 'scoped memory for tpu_custom_call.1']
    #allocation6 [shape = 'u8[65536]{0}', space=vmem, size = 0x10000, scoped, tag = 'input window, operand 1, single buffered']
    #allocation7 [shape = 's32[1]{0}', space=sflag, size = 0x4, scoped, tag = 'scoped memory for tpu_custom_call.1']
    #allocation8 [shape = 'u8[4096]{0}', space=vmem, size = 0x1000, scoped, tag = 'output window, operand 0, single buffered']
    %8 = vsyncpa [#allocation4], 0
    %9 = vsyncpa [#allocation7], 0
    %10 = vsyncpa [#allocation5], 0
    // Predicated region
    $region2: #{tpu_custom_call.1} parent=1 // pred_check
      _
    $region3: #{tpu_custom_call.1} parent=1 // pred_check_branch
      %12 = sbr.rel (0) target = $region5
    $region4: #{tpu_custom_call.1} parent=1 // pred_region
      %14 = vsyncadd [#allocation4], 0
      %s16 = sshll.u32 %s0, 4
      %s17 = int_to_ptr.hbm [resolvable:$true] %s16
      %s18 = sshll.u32 [#allocation3], 4
      %s19 = int_to_ptr.vmem [resolvable:$true] %s18
      %21 = dma.hbm_to_vmem [thread:$0]  %s17, 128, %s19, [#allocation4]
    $region5: #{tpu_custom_call.1} parent=1 // pred_fallthru
      _
    // Predicated region
    $region6: #{tpu_custom_call.1} parent=1 // pred_check
      _
    $region7: #{tpu_custom_call.1} parent=1 // pred_check_branch
      %23 = sbr.rel (0) target = $region9
    $region8: #{tpu_custom_call.1} parent=1 // pred_region
      %25 = vsyncadd [#allocation7], 0
      %s26 = sshll.u32 %s1, 4
      %s27 = int_to_ptr.hbm [resolvable:$true] %s26
      %s28 = sshll.u32 [#allocation6], 4
      %s29 = int_to_ptr.vmem [resolvable:$true] %s28
      %34 = dma.hbm_to_vmem [thread:$0]  %s27, 2048, %s29, [#allocation7], 128, 128, 8
    $region9: #{tpu_custom_call.1} parent=1 // pred_fallthru
      _
    // Predicated region
    $region10: #{tpu_custom_call.1} parent=1 // pred_check
      _
    $region11: #{tpu_custom_call.1} parent=1 // pred_check_branch
      %36 = sbr.rel (0) target = $region13
    $region12: #{tpu_custom_call.1} parent=1 // pred_region
      _
    $region13: #{tpu_custom_call.1} parent=1 // pred_fallthru
      _
    // Predicated region
    $region14: #{tpu_custom_call.1} parent=1 // pred_check
      _
    $region15: #{tpu_custom_call.1} parent=1 // pred_check_branch
      %38 = sbr.rel (0) target = $region17
    $region16: #{tpu_custom_call.1} parent=1 // pred_region
      %40 = dma.done [#allocation4], 128
    $region17: #{tpu_custom_call.1} parent=1 // pred_fallthru
      _
    // Predicated region
    $region18: #{tpu_custom_call.1} parent=1 // pred_check
      _
    $region19: #{tpu_custom_call.1} parent=1 // pred_check_branch
      %42 = sbr.rel (0) target = $region21
    $region20: #{tpu_custom_call.1} parent=1 // pred_region
      %44 = dma.done [#allocation7], 2048
    $region21: #{tpu_custom_call.1} parent=1 // pred_fallthru
      _
    %p45 = scmp.eq.s32.totalorder 0, 0
    // Predicated region
    $region22: #{tpu_custom_call.1} parent=1 // pred_check
      %p46 = pneg %p45
    $region23: #{tpu_custom_call.1} parent=1 // pred_check_branch
      %48 = sbr.rel (%p46) target = $region25
    $region24: #{tpu_custom_call.1} parent=1 // pred_region
      %49 = vst [vmem:[#allocation2] sm:$0xff] 0.0
    $region25: #{tpu_custom_call.1} parent=1 // pred_fallthru
      _
    %v50 = vld [vmem:[#allocation2] sm:$0xff]
    %v51 = vld [vmem:[#allocation3] sm:$0xff]
    %v52 = vld [vmem:[#allocation6] sm:$0xff]
    %v53 = vld [vmem:[#allocation6 + $0x8] sm:$0xff]
    %v54 = vld [vmem:[#allocation6 + $0x10] sm:$0xff]
    %v55 = vld [vmem:[#allocation6 + $0x18] sm:$0xff]
    %v56 = vld [vmem:[#allocation6 + $0x20] sm:$0xff]
    %v57 = vld [vmem:[#allocation6 + $0x28] sm:$0xff]
    %v58 = vld [vmem:[#allocation6 + $0x30] sm:$0xff]
    %v59 = vld [vmem:[#allocation6 + $0x38] sm:$0xff]
    %v60 = vld [vmem:[#allocation6 + $0x40] sm:$0xff]
    %v61 = vld [vmem:[#allocation6 + $0x48] sm:$0xff]
    %v62 = vld [vmem:[#allocation6 + $0x50] sm:$0xff]
    %v63 = vld [vmem:[#allocation6 + $0x58] sm:$0xff]
    %v64 = vld [vmem:[#allocation6 + $0x60] sm:$0xff]
    %v65 = vld [vmem:[#allocation6 + $0x68] sm:$0xff]
    %v66 = vld [vmem:[#allocation6 + $0x70] sm:$0xff]
    %v67 = vld [vmem:[#allocation6 + $0x78] sm:$0xff]
    %68 = vmatpush.msra.mxu0 %v67
    %69 = vmatpush.msra.mxu0 %v66
    %70 = vmatpush.msra.mxu0 %v65
    %71 = vmatpush.msra.mxu0 %v64
    %72 = vmatpush.msra.mxu0 %v63
    %73 = vmatpush.msra.mxu0 %v62
    %74 = vmatpush.msra.mxu0 %v61
    %75 = vmatpush.msra.mxu0 %v60
    %76 = vmatpush.msra.mxu0 %v59
    %77 = vmatpush.msra.mxu0 %v58
    %78 = vmatpush.msra.mxu0 %v57
    %79 = vmatpush.msra.mxu0 %v56
    %80 = vmatpush.msra.mxu0 %v55
    %81 = vmatpush.msra.mxu0 %v54
    %82 = vmatpush.msra.mxu0 %v53
    %83 = vmatpush.msra.mxu0 %v52
    %84 = vmatmul.f32.gmra.mxu0 %v51
    %v85 = vpop.f32.mrf.mxu0
    %v86 = vadd.f32 0.0, %v85
    %87 = vdwg.mxu0
    %v88 = vadd.f32 %v50, %v86
    %89 = vst [vmem:[#allocation2] sm:$0xff] %v88
    // Predicated region
    $region26: #{tpu_custom_call.1} parent=1 // pred_check
      %p90 = pneg %p45
    $region27: #{tpu_custom_call.1} parent=1 // pred_check_branch
      %92 = sbr.rel (%p90) target = $region29
    $region28: #{tpu_custom_call.1} parent=1 // pred_region
      %v93 = vld [vmem:[#allocation2] sm:$0xff]
      %v94 = vld [vmem:[%s2] sm:$0x1]
      %v96 = vperm.slane %v94, 0
      %v98 = vadd.f32 %v93, %v96
      %v99 = vmul.f32 %v98, 0.70710677
      %v100 = vmul.f32 %v99, %v99
      %v101 = vmin.f32 16.0, %v100
      %v102 = vmul.f32 %v101, 2.1237322e-06
      %v103 = vadd.f32 %v102, 0.00028619796
      %v104 = vmul.f32 %v101, %v103
      %v105 = vadd.f32 %v104, 0.0036580483
      %v106 = vmul.f32 %v101, %v105
      %v107 = vadd.f32 %v106, 0.05243302
      %v108 = vmul.f32 %v101, %v107
      %v109 = vadd.f32 %v108, 0.18741608
      %v110 = vmul.f32 %v101, %v109
      %v111 = vadd.f32 %v110, 1.1283791
      %v112 = vmul.f32 %v99, %v111
      %v113 = vmul.f32 %v101, 3.8918573e-05
      %v114 = vadd.f32 %v113, 0.001143296
      %v115 = vmul.f32 %v101, %v114
      %v116 = vadd.f32 %v115, 0.014752088
      %v117 = vmul.f32 %v101, %v116
      %v118 = vadd.f32 %v117, 0.112945676
      %v119 = vmul.f32 %v101, %v118
      %v120 = vadd.f32 %v119, 0.4994258
      %v121 = vmul.f32 %v101, %v120
      %v122 = vadd.f32 %v121, 1.0
      %v123 = vrcp.pop %v122
      %v124 = vmul.f32 %v122, %v123
      %v125 = vsub.f32 1.0, %v124
      %v126 = vmul.f32 %v123, %v125
      %v127 = vadd.f32 %v123, %v126
      %vm128 = vweird.f32 %v122
      %vm129 = vweird.f32 %v123
      %vm130 = vmor %vm128, %vm129
      %v131 = vsel %vm130, %v123, %v127
      %v132 = vand.u32 2147483647, %v122
      %vm133 = vcmp.eq.f32.partialorder %v132, 8.507059e+37
      %v134 = vand.u32 %v122, 2147483648
      %v135 = vor.u32 1.1754944e-38, %v134
      %v136 = vsel %vm133, %v135, %v131
      %v137 = vmul.f32 %v112, %v136
      %v138 = vmin.f32 %v137, 1.0
      %v139 = vmax.f32 %v138, -1.0
      %v140 = vmul.f32 %v139, 0.5
      %v141 = vadd.f32 %v140, 0.5
      %v142 = vmul.f32 %v98, %v141
      %143 = vst [vmem:[#allocation8] sm:$0xff] %v142
    $region29: #{tpu_custom_call.1} parent=1 // pred_fallthru
      _
    // Predicated region
    $region30: #{tpu_custom_call.1} parent=1 // pred_check
      _
    $region31: #{tpu_custom_call.1} parent=1 // pred_check_branch
      %145 = sbr.rel (0) target = $region33
    $region32: #{tpu_custom_call.1} parent=1 // pred_region
      %147 = vsyncadd [#allocation5], 0
      %s149 = sshll.u32 [#allocation8], 4
      %s150 = int_to_ptr.vmem [resolvable:$true] %s149
      %s151 = sshll.u32 %s3, 4
      %s152 = int_to_ptr.hbm [resolvable:$true] %s151
      %154 = dma.vmem_to_hbm [thread:$0]  %s150, 128, %s152, [#allocation5]
    $region33: #{tpu_custom_call.1} parent=1 // pred_fallthru
      _
    // Predicated region
    $region34: #{tpu_custom_call.1} parent=1 // pred_check
      _
    $region35: #{tpu_custom_call.1} parent=1 // pred_check_branch
      %156 = sbr.rel (0) target = $region37
    $region36: #{tpu_custom_call.1} parent=1 // pred_region
      %158 = dma.done [#allocation5], 128
    $region37: #{tpu_custom_call.1} parent=1 // pred_fallthru
      _
    %159 = vsyncpa [#allocation4], 1
    %160 = vsyncpa [#allocation7], 1
    %161 = vsyncpa [#allocation5], 1

</llo_original>
